<compile_context>
chip_gen: v7x
topology: tpu7x:2x2x1
jax: 0.10.0
libtpu: 0.0.40
codegen_flags: <defaults>
</compile_context>

<pallas_src>
import math
import functools

import numpy as np
import jax
import jax.numpy as jnp
from jax.experimental import pallas as pl
from jax.experimental.pallas import tpu as pltpu


def _pos_embed_fill_kernel(y_ref, x_ref, o_ref, *, f):
    """Broadcast-fill one output block.

    y_ref: (F, th, 1)  per-(channel,row) values for this row tile
    x_ref: (F, 1, W)   per-(channel,col) values (grid-invariant)
    o_ref: (2F, th, W) output block (channel-major NCHW slab)
    """
    _, th, w = o_ref.shape
    y_half = jnp.broadcast_to(y_ref[...], (f, th, w))   # lane broadcast
    x_half = jnp.broadcast_to(x_ref[...], (f, th, w))   # sublane broadcast
    o_ref[0:f, :, :] = y_half.astype(o_ref.dtype)
    o_ref[f:2 * f, :, :] = x_half.astype(o_ref.dtype)


def _pick_row_tile(h, w, c2, max_block_bytes=2 << 20):
    """Row-tile height: multiple of 8 (or full H), ~<=2 MiB padded block."""
    wp = ((w + 127) // 128) * 128              # lane-padded width (vreg accounting)
    th = max_block_bytes // (c2 * wp * 4)
    th = max(8, (th // 8) * 8)
    if th >= h:
        th = h                                 # full extent: always a legal block dim
    # v7x has two TensorCores: make the "parallel" grid axis >= 2 steps.
    if pl.cdiv(h, th) < 2 and h >= 16:
        th = ((h // 2 + 7) // 8) * 8
    return th


def position_embedding_sine_2d(x, num_pos_feats=64, temperature=10000,
                               normalize=False, scale=None,
                               out_dtype=jnp.float32):
    """Pallas implementation of PositionEmbeddingSine2D.forward.

    x: (B, C, H, W) array (values unused, only shape matters, as in the
       PyTorch module). Returns (B, 2*num_pos_feats, H, W) in `out_dtype`.
    """
    if scale is not None and normalize is False:
        raise ValueError("normalize should be True if scale is passed")
    if scale is None:
        scale = 2 * math.pi

    b, _, h, w = x.shape
    f = num_pos_feats
    c2 = 2 * f

    # ---- trace-time tables (numpy, float64 -> float32): O(F*(H+W)) ---------
    k = np.arange(f, dtype=np.float64)
    dim_t = float(temperature) ** (2.0 * np.floor(k / 2.0) / float(f))   # (F,)
    even = (k.astype(np.int64) % 2) == 0                                 # even ch -> sin, odd -> cos

    y_embed = np.arange(1, h + 1, dtype=np.float64)   # cumsum of ones == idx + 1
    x_embed = np.arange(1, w + 1, dtype=np.float64)
    if normalize:
        eps = 1e-6
        y_embed = (y_embed - 0.5) / (float(h) + eps) * float(scale)
        x_embed = (x_embed - 0.5) / (float(w) + eps) * float(scale)

    arg_y = y_embed[None, :] / dim_t[:, None]          # (F, H)
    arg_x = x_embed[None, :] / dim_t[:, None]          # (F, W)
    y_tab = np.where(even[:, None], np.sin(arg_y), np.cos(arg_y)).astype(np.float32)
    x_tab = np.where(even[:, None], np.sin(arg_x), np.cos(arg_x)).astype(np.float32)

    y_col = jnp.asarray(y_tab.reshape(f, h, 1))        # (F, H, 1)
    x_row = jnp.asarray(x_tab.reshape(f, 1, w))        # (F, 1, W)

    # ---- Pallas broadcast-fill kernel: grid over row tiles -----------------
    th = _pick_row_tile(h, w, c2)
    grid = (pl.cdiv(h, th),)

    kernel = functools.partial(_pos_embed_fill_kernel, f=f)
    out = pl.pallas_call(
        kernel,
        out_shape=jax.ShapeDtypeStruct((c2, h, w), out_dtype),
        grid=grid,
        in_specs=[
            pl.BlockSpec((f, th, 1), lambda i: (0, i, 0)),   # y table (row tile)
            pl.BlockSpec((f, 1, w), lambda i: (0, 0, 0)),    # x table (constant)
        ],
        out_specs=pl.BlockSpec((c2, th, w), lambda i: (0, i, 0)),
        compiler_params=pltpu.CompilerParams(
            dimension_semantics=("parallel",)),
    )(y_col, x_row)

    # Free reshape to NCHW; batch broadcast kept lazy (batch-invariant result).
    out = out.reshape(1, c2, h, w)
    return jnp.broadcast_to(out, (b, c2, h, w))


def _reference_pos_embed(x, num_pos_feats=64, temperature=10000,
                         normalize=False, scale=None):
    """Pure-JAX port of the PyTorch forward (for verification)."""
    if scale is None:
        scale = 2 * math.pi
    b, _, h, w = x.shape
    not_mask = jnp.ones((b, h, w), jnp.float32)
    y_embed = jnp.cumsum(not_mask, axis=1)
    x_embed = jnp.cumsum(not_mask, axis=2)
    if normalize:
        eps = 1e-6
        y_embed = (y_embed - 0.5) / (y_embed[:, -1:, :] + eps) * scale
        x_embed = (x_embed - 0.5) / (x_embed[:, :, -1:] + eps) * scale
    dim_t = jnp.arange(num_pos_feats, dtype=jnp.float32)
    dim_t = temperature ** (2 * (dim_t // 2) / num_pos_feats)
    pos_x = x_embed[:, :, :, None] / dim_t
    pos_y = y_embed[:, :, :, None] / dim_t
    pos_x = jnp.stack(
        [jnp.sin(pos_x[..., 0::2]), jnp.cos(pos_x[..., 1::2])], axis=4
    ).reshape(b, h, w, -1)
    pos_y = jnp.stack(
        [jnp.sin(pos_y[..., 0::2]), jnp.cos(pos_y[..., 1::2])], axis=4
    ).reshape(b, h, w, -1)
    pos = jnp.concatenate([pos_y, pos_x], axis=3).transpose(0, 3, 1, 2)
    return pos


if __name__ == "__main__":
    key = jax.random.PRNGKey(0)
    # Small NCHW input consistent with the module (values unused, shape matters).
    x = jax.random.normal(key, (2, 4, 16, 16), dtype=jnp.float32)

    # default settings (normalize=False)
    pos = position_embedding_sine_2d(x, num_pos_feats=64)
    pos = jax.block_until_ready(pos)
    ref = jax.block_until_ready(_reference_pos_embed(x, num_pos_feats=64))
    assert pos.shape == (2, 128, 16, 16), pos.shape
    assert jnp.max(jnp.abs(pos - ref)) < 1e-4

    # normalized variant
    pos_n = position_embedding_sine_2d(x, num_pos_feats=64, normalize=True)
    pos_n = jax.block_until_ready(pos_n)
    ref_n = jax.block_until_ready(
        _reference_pos_embed(x, num_pos_feats=64, normalize=True))
    assert jnp.max(jnp.abs(pos_n - ref_n)) < 1e-4

    print("KERNEL_OK")
</pallas_src>

<mosaic_0001>
module attributes {stable_mosaic.version = 11 : i64} {
  func.func @_pos_embed_fill_kernel(%arg0: i32, %arg1: memref<64x8x1xf32, #tpu.memory_space<vmem>>, %arg2: memref<64x1x16xf32, #tpu.memory_space<vmem>>, %arg3: memref<128x8x16xf32, #tpu.memory_space<vmem>>) attributes {dimension_semantics = [#tpu.dimension_semantics<parallel>], iteration_bounds = array<i64: 2>, scalar_prefetch = 0 : i64, scratch_operands = 0 : i64, tpu.core_type = #tpu.core_type<tc>, window_params = [{transform_indices = @transform_0, window_bounds = array<i64: 64, 8, 1>}, {pipeline_mode = #tpu.pipeline_mode<synchronous>, transform_indices = @transform_1, window_bounds = array<i64: 64, 1, 16>}, {transform_indices = @transform_2, window_bounds = array<i64: 128, 8, 16>}]} {
    %c0 = arith.constant 0 : index
    %c0_0 = arith.constant 0 : index
    %c0_1 = arith.constant 0 : index
    %0 = vector.load %arg1[%c0, %c0_0, %c0_1] : memref<64x8x1xf32, #tpu.memory_space<vmem>>, vector<64x8x1xf32>
    %1 = vector.shape_cast %0 : vector<64x8x1xf32> to vector<64x8x1xf32>
    %2 = vector.broadcast %1 : vector<64x8x1xf32> to vector<64x8x16xf32>
    %c0_2 = arith.constant 0 : index
    %c0_3 = arith.constant 0 : index
    %c0_4 = arith.constant 0 : index
    %3 = vector.load %arg2[%c0_2, %c0_3, %c0_4] : memref<64x1x16xf32, #tpu.memory_space<vmem>>, vector<64x1x16xf32>
    %4 = vector.shape_cast %3 : vector<64x1x16xf32> to vector<64x1x16xf32>
    %5 = vector.broadcast %4 : vector<64x1x16xf32> to vector<64x8x16xf32>
    %c0_5 = arith.constant 0 : index
    %c0_6 = arith.constant 0 : index
    %c0_7 = arith.constant 0 : index
    %6 = vector.load %arg3[%c0_5, %c0_6, %c0_7] : memref<128x8x16xf32, #tpu.memory_space<vmem>>, vector<64x8x16xf32>
    tpu.vector_store %arg3[%c0_5, %c0_6, %c0_7], %2 {strides = array<i32>} : memref<128x8x16xf32, #tpu.memory_space<vmem>>, vector<64x8x16xf32>,
    %c64 = arith.constant 64 : index
    %c0_8 = arith.constant 0 : index
    %c0_9 = arith.constant 0 : index
    %7 = vector.load %arg3[%c64, %c0_8, %c0_9] : memref<128x8x16xf32, #tpu.memory_space<vmem>>, vector<64x8x16xf32>
    tpu.vector_store %arg3[%c64, %c0_8, %c0_9], %5 {strides = array<i32>} : memref<128x8x16xf32, #tpu.memory_space<vmem>>, vector<64x8x16xf32>,
    return
  }
  func.func @transform_0(%arg0: i32) -> (i32, i32, i32) {
    %c0_i32 = arith.constant 0 : i32
    %c0_i32_0 = arith.constant 0 : i32
    %c0_i32_1 = arith.constant 0 : i32
    return %c0_i32, %arg0, %c0_i32_0 : i32, i32, i32
  }
  func.func @transform_1(%arg0: i32) -> (i32, i32, i32) {
    %c0_i32 = arith.constant 0 : i32
    %c0_i32_0 = arith.constant 0 : i32
    %c0_i32_1 = arith.constant 0 : i32
    %c0_i32_2 = arith.constant 0 : i32
    return %c0_i32, %c0_i32_0, %c0_i32_1 : i32, i32, i32
  }
  func.func @transform_2(%arg0: i32) -> (i32, i32, i32) {
    %c0_i32 = arith.constant 0 : i32
    %c0_i32_0 = arith.constant 0 : i32
    %c0_i32_1 = arith.constant 0 : i32
    return %c0_i32, %arg0, %c0_i32_0 : i32, i32, i32
  }
}

</mosaic_0001>

<llo_original>
// kernel: tpu_custom_call.1
$region0: #{tpu_custom_call.1}
  #allocation0 [shape = 'u32[]', space=smem, size = 0x4, offset = 0x4, fixed_abs, tag = 'smem constant byte address 0x4 - core index']
  #allocation1 [shape = 'u32[144,128]{1,0:T(1,128)}', space=vmem, size = 0x12000, scoped, tag = 'internal scratch']
  %s0 = inlined_call_operand.vmem [shape: f32[64,16,1], index: 0, kind: input, shape index: {}]
  %s1 = inlined_call_operand.vmem [shape: f32[64,1,16], index: 1, kind: input, shape index: {}]
  %s2 = inlined_call_operand.vmem [shape: f32[128,16,16], index: 2, kind: output, shape index: {}]
  %s3 = sld [smem:[#allocation0]]
  $region113: #{tpu_custom_call.1} parent=0
    _
  %s5 = ssub.s32 1, %s3
  %s6 = scalar_select 0, %s5, %s3
  $region1: #{tpu_custom_call.1} parent=0
    #allocation2 [shape = 'u8[524288]{0}', space=vmem, size = 0x80000, scoped, tag = 'input window, operand 0']
    #allocation3 [shape = 'u8[1048576]{0}', space=vmem, size = 0x100000, scoped, tag = 'output window, operand 0']
    loop: start=0, step=1, limit=4
    $region2: #{tpu_custom_call.1} parent=1 // loop_pre_header
      _
    $region3: #{tpu_custom_call.1} parent=1 // loop_header
      %s8 = sphi 0, %s12
      %p9 = scmp.ge.s32.totalorder %s8, 4
      %s18 = sphi 0, %s20
      %s21 = sphi 0, %s18
      %s22 = sphi 0, %s21
      %s38 = sphi 0, %s22
      %s42 = sphi 0, %s42
      %s44 = sphi 0, %s42
      %s45 = sphi 0, %s44
      %s59 = sphi 0, %s45
      %s65 = sphi 0, %s67
      %s68 = sphi 0, %s65
      %s69 = sphi 0, %s68
      %s85 = sphi 0, %s69
    $region4: #{tpu_custom_call.1} parent=1 // loop_header_branch
      %11 = sbr.rel (%p9) target = $region8
    $region5: #{tpu_custom_call.1} parent=1 // loop_body
      %s13 = ssub.s32 %s8, 1
      %s14 = ssub.s32 %s8, 2
      %s15 = sadd.s32 %s8, 1
      %s16 = ssub.s32 %s8, %s15
      %p17 = scmp.eq.s32.totalorder %s16, 0
      %s19 = sadd.s32 %s18, 1
      %s20 = scalar_select %p17, %s18, %s19
      %p23 = pneg %p17
      %p24 = scmp.eq.s32.totalorder %s8, 1
      %p25 = por %p23, %p24
      %p26 = scmp.ne.s32.totalorder %s18, %s21
      %p27 = scmp.eq.s32.totalorder %s8, 0
      %p28 = por %p26, %p27
      %p29 = scmp.ne.s32.totalorder %s18, %s21
      %p30 = scmp.eq.s32.totalorder %s13, 1
      %p31 = por %p29, %p30
      %p32 = scmp.ne.s32.totalorder %s21, %s22
      %p33 = scmp.eq.s32.totalorder %s13, 0
      %p34 = por %p32, %p33
      %p35 = scmp.ne.s32.totalorder %s21, %s22
      %p36 = scmp.eq.s32.totalorder %s14, 1
      %p37 = por %p35, %p36
      %p39 = scmp.ne.s32.totalorder %s22, %s38
      %p40 = scmp.eq.s32.totalorder %s14, 0
      %p41 = por %p39, %p40
      %s43 = sadd.s32 %s42, 1
      %p46 = scmp.eq.s32.totalorder %s8, 1
      %p47 = scmp.ne.s32.totalorder %s42, %s44
      %p48 = scmp.eq.s32.totalorder %s8, 0
      %p49 = por %p47, %p48
      %p50 = scmp.ne.s32.totalorder %s42, %s44
      %p51 = scmp.eq.s32.totalorder %s13, 1
      %p52 = por %p50, %p51
      %p53 = scmp.ne.s32.totalorder %s44, %s45
      %p54 = scmp.eq.s32.totalorder %s13, 0
      %p55 = por %p53, %p54
      %p56 = scmp.ne.s32.totalorder %s44, %s45
      %p57 = scmp.eq.s32.totalorder %s14, 1
      %p58 = por %p56, %p57
      %p60 = scmp.ne.s32.totalorder %s45, %s59
      %p61 = scmp.eq.s32.totalorder %s14, 0
      %p62 = por %p60, %p61
      %s63 = ssub.s32 %s8, %s15
      %p64 = scmp.eq.s32.totalorder %s63, 0
      %s66 = sadd.s32 %s65, 1
      %s67 = scalar_select %p64, %s65, %s66
      %p70 = pneg %p64
      %p71 = scmp.eq.s32.totalorder %s8, 1
      %p72 = por %p70, %p71
      %p73 = scmp.ne.s32.totalorder %s65, %s68
      %p74 = scmp.eq.s32.totalorder %s8, 0
      %p75 = por %p73, %p74
      %p76 = scmp.ne.s32.totalorder %s65, %s68
      %p77 = scmp.eq.s32.totalorder %s13, 1
      %p78 = por %p76, %p77
      %p79 = scmp.ne.s32.totalorder %s68, %s69
      %p80 = scmp.eq.s32.totalorder %s13, 0
      %p81 = por %p79, %p80
      %p82 = scmp.ne.s32.totalorder %s68, %s69
      %p83 = scmp.eq.s32.totalorder %s14, 1
      %p84 = por %p82, %p83
      %p86 = scmp.ne.s32.totalorder %s69, %s85
      %p87 = scmp.eq.s32.totalorder %s14, 0
      %p88 = por %p86, %p87
      %p89 = scmp.le.s32.totalorder 1, %s8
      %p90 = scmp.lt.s32.totalorder %s8, 3
      %p91 = pnand %p89, %p90
      %p92 = pneg %p91
      // Predicated region
      $region9: #{tpu_custom_call.1} parent=5 // pred_check
        _
      $region10: #{tpu_custom_call.1} parent=5 // pred_check_branch
        %94 = sbr.rel (%p91) target = $region12
      $region11: #{tpu_custom_call.1} parent=5 // pred_region
        %s95 = ssub.s32 %s8, 1
        // Predicated region
        $region13: #{tpu_custom_call.1} parent=11 // pred_check
          %p96 = pneg %p55
        $region14: #{tpu_custom_call.1} parent=11 // pred_check_branch
          %98 = sbr.rel (%p96) target = $region16
        $region15: #{tpu_custom_call.1} parent=11 // pred_region
          _
        $region16: #{tpu_custom_call.1} parent=11 // pred_fallthru
          _
      $region12: #{tpu_custom_call.1} parent=5 // pred_fallthru
        _
      %p99 = scmp.lt.s32.totalorder %s8, 2
      // Predicated region
      $region17: #{tpu_custom_call.1} parent=5 // pred_check
        %p100 = pneg %p99
      $region18: #{tpu_custom_call.1} parent=5 // pred_check_branch
        %102 = sbr.rel (%p100) target = $region20
      $region19: #{tpu_custom_call.1} parent=5 // pred_region
        // Predicated region
        $region21: #{tpu_custom_call.1} parent=19 // pred_check
          %p103 = pneg %p28
        $region22: #{tpu_custom_call.1} parent=19 // pred_check_branch
          %105 = sbr.rel (%p103) target = $region24
        $region23: #{tpu_custom_call.1} parent=19 // pred_region
          %s106 = sand.u32 %s18, 1
          %s107 = sand.u32 %s18, 1
          %s108 = smul.addr %s107, 512
          %s109 = scalar_lea.vmem [#allocation2], %s108
          %s110 = smul.addr %s8, 8
          %s111 = scalar_lea.vmem %s0, %s110
          // Predicated region
          $region25: #{tpu_custom_call.1} parent=23 // pred_check
            _
          $region26: #{tpu_custom_call.1} parent=23 // pred_check_branch
            %113 = sbr.rel (0) target = $region28
          $region27: #{tpu_custom_call.1} parent=23 // pred_region
            // Predicated region
            $region29: #{tpu_custom_call.1} parent=27 // pred_check
              _
            $region30: #{tpu_custom_call.1} parent=27 // pred_check_branch
              %115 = sbr.rel (0) target = $region32
            $region31: #{tpu_custom_call.1} parent=27 // pred_region
              // Predicated region
              $region44: #{tpu_custom_call.1} parent=31 // pred_check
                _
              $region45: #{tpu_custom_call.1} parent=31 // pred_check_branch
                %256 = sbr.rel (0) target = $region47
              $region46: #{tpu_custom_call.1} parent=31 // pred_region
                loop: start=0, step=1, limit=1
                $region48: #{tpu_custom_call.1} parent=46 // loop_pre_header
                  _
                $region49: #{tpu_custom_call.1} parent=46 // loop_header
                  %s258 = sphi 0, %s262
                  %p259 = scmp.ge.s32.totalorder %s258, 1
                  %s263 = sphi %s111, %s111
                  %s264 = sphi %s109, %s109
                $region50: #{tpu_custom_call.1} parent=46 // loop_header_branch
                  %261 = sbr.rel (%p259) target = $region54
                $region51: #{tpu_custom_call.1} parent=46 // loop_body
                  %v265 = vld [vmem:[%s263] sm:$0xff]
                  %266 = vst [vmem:[%s264] sm:$0xff] %v265
                  %v267 = vld [vmem:[%s263 + $0x10] sm:$0xff]
                  %268 = vst [vmem:[%s264 + $0x8] sm:$0xff] %v267
                  %v269 = vld [vmem:[%s263 + $0x20] sm:$0xff]
                  %270 = vst [vmem:[%s264 + $0x10] sm:$0xff] %v269
                  %v271 = vld [vmem:[%s263 + $0x30] sm:$0xff]
                  %272 = vst [vmem:[%s264 + $0x18] sm:$0xff] %v271
                  %v273 = vld [vmem:[%s263 + $0x40] sm:$0xff]
                  %274 = vst [vmem:[%s264 + $0x20] sm:$0xff] %v273
                  %v275 = vld [vmem:[%s263 + $0x50] sm:$0xff]
                  %276 = vst [vmem:[%s264 + $0x28] sm:$0xff] %v275
                  %v277 = vld [vmem:[%s263 + $0x60] sm:$0xff]
                  %278 = vst [vmem:[%s264 + $0x30] sm:$0xff] %v277
                  %v279 = vld [vmem:[%s263 + $0x70] sm:$0xff]
                  %280 = vst [vmem:[%s264 + $0x38] sm:$0xff] %v279
                  %v281 = vld [vmem:[%s263 + $0x80] sm:$0xff]
                  %282 = vst [vmem:[%s264 + $0x40] sm:$0xff] %v281
                  %v283 = vld [vmem:[%s263 + $0x90] sm:$0xff]
                  %284 = vst [vmem:[%s264 + $0x48] sm:$0xff] %v283
                  %v285 = vld [vmem:[%s263 + $0xa0] sm:$0xff]
                  %286 = vst [vmem:[%s264 + $0x50] sm:$0xff] %v285
                  %v287 = vld [vmem:[%s263 + $0xb0] sm:$0xff]
                  %288 = vst [vmem:[%s264 + $0x58] sm:$0xff] %v287
                  %v289 = vld [vmem:[%s263 + $0xc0] sm:$0xff]
                  %290 = vst [vmem:[%s264 + $0x60] sm:$0xff] %v289
                  %v291 = vld [vmem:[%s263 + $0xd0] sm:$0xff]
                  %292 = vst [vmem:[%s264 + $0x68] sm:$0xff] %v291
                  %v293 = vld [vmem:[%s263 + $0xe0] sm:$0xff]
                  %294 = vst [vmem:[%s264 + $0x70] sm:$0xff] %v293
                  %v295 = vld [vmem:[%s263 + $0xf0] sm:$0xff]
                  %296 = vst [vmem:[%s264 + $0x78] sm:$0xff] %v295
                  %v297 = vld [vmem:[%s263 + $0x100] sm:$0xff]
                  %298 = vst [vmem:[%s264 + $0x80] sm:$0xff] %v297
                  %v299 = vld [vmem:[%s263 + $0x110] sm:$0xff]
                  %300 = vst [vmem:[%s264 + $0x88] sm:$0xff] %v299
                  %v301 = vld [vmem:[%s263 + $0x120] sm:$0xff]
                  %302 = vst [vmem:[%s264 + $0x90] sm:$0xff] %v301
                  %v303 = vld [vmem:[%s263 + $0x130] sm:$0xff]
                  %304 = vst [vmem:[%s264 + $0x98] sm:$0xff] %v303
                  %v305 = vld [vmem:[%s263 + $0x140] sm:$0xff]
                  %306 = vst [vmem:[%s264 + $0xa0] sm:$0xff] %v305
                  %v307 = vld [vmem:[%s263 + $0x150] sm:$0xff]
                  %308 = vst [vmem:[%s264 + $0xa8] sm:$0xff] %v307
                  %v309 = vld [vmem:[%s263 + $0x160] sm:$0xff]
                  %310 = vst [vmem:[%s264 + $0xb0] sm:$0xff] %v309
                  %v311 = vld [vmem:[%s263 + $0x170] sm:$0xff]
                  %312 = vst [vmem:[%s264 + $0xb8] sm:$0xff] %v311
                  %v313 = vld [vmem:[%s263 + $0x180] sm:$0xff]
                  %314 = vst [vmem:[%s264 + $0xc0] sm:$0xff] %v313
                  %v315 = vld [vmem:[%s263 + $0x190] sm:$0xff]
                  %316 = vst [vmem:[%s264 + $0xc8] sm:$0xff] %v315
                  %v317 = vld [vmem:[%s263 + $0x1a0] sm:$0xff]
                  %318 = vst [vmem:[%s264 + $0xd0] sm:$0xff] %v317
                  %v319 = vld [vmem:[%s263 + $0x1b0] sm:$0xff]
                  %320 = vst [vmem:[%s264 + $0xd8] sm:$0xff] %v319
                  %v321 = vld [vmem:[%s263 + $0x1c0] sm:$0xff]
                  %322 = vst [vmem:[%s264 + $0xe0] sm:$0xff] %v321
                  %v323 = vld [vmem:[%s263 + $0x1d0] sm:$0xff]
                  %324 = vst [vmem:[%s264 + $0xe8] sm:$0xff] %v323
                  %v325 = vld [vmem:[%s263 + $0x1e0] sm:$0xff]
                  %326 = vst [vmem:[%s264 + $0xf0] sm:$0xff] %v325
                  %v327 = vld [vmem:[%s263 + $0x1f0] sm:$0xff]
                  %328 = vst [vmem:[%s264 + $0xf8] sm:$0xff] %v327
                  %v329 = vld [vmem:[%s263 + $0x200] sm:$0xff]
                  %330 = vst [vmem:[%s264 + $0x100] sm:$0xff] %v329
                  %v331 = vld [vmem:[%s263 + $0x210] sm:$0xff]
                  %332 = vst [vmem:[%s264 + $0x108] sm:$0xff] %v331
                  %v333 = vld [vmem:[%s263 + $0x220] sm:$0xff]
                  %334 = vst [vmem:[%s264 + $0x110] sm:$0xff] %v333
                  %v335 = vld [vmem:[%s263 + $0x230] sm:$0xff]
                  %336 = vst [vmem:[%s264 + $0x118] sm:$0xff] %v335
                  %v337 = vld [vmem:[%s263 + $0x240] sm:$0xff]
                  %338 = vst [vmem:[%s264 + $0x120] sm:$0xff] %v337
                  %v339 = vld [vmem:[%s263 + $0x250] sm:$0xff]
                  %340 = vst [vmem:[%s264 + $0x128] sm:$0xff] %v339
                  %v341 = vld [vmem:[%s263 + $0x260] sm:$0xff]
                  %342 = vst [vmem:[%s264 + $0x130] sm:$0xff] %v341
                  %v343 = vld [vmem:[%s263 + $0x270] sm:$0xff]
                  %344 = vst [vmem:[%s264 + $0x138] sm:$0xff] %v343
                  %v345 = vld [vmem:[%s263 + $0x280] sm:$0xff]
                  %346 = vst [vmem:[%s264 + $0x140] sm:$0xff] %v345
                  %v347 = vld [vmem:[%s263 + $0x290] sm:$0xff]
                  %348 = vst [vmem:[%s264 + $0x148] sm:$0xff] %v347
                  %v349 = vld [vmem:[%s263 + $0x2a0] sm:$0xff]
                  %350 = vst [vmem:[%s264 + $0x150] sm:$0xff] %v349
                  %v351 = vld [vmem:[%s263 + $0x2b0] sm:$0xff]
                  %352 = vst [vmem:[%s264 + $0x158] sm:$0xff] %v351
                  %v353 = vld [vmem:[%s263 + $0x2c0] sm:$0xff]
                  %354 = vst [vmem:[%s264 + $0x160] sm:$0xff] %v353
                  %v355 = vld [vmem:[%s263 + $0x2d0] sm:$0xff]
                  %356 = vst [vmem:[%s264 + $0x168] sm:$0xff] %v355
                  %v357 = vld [vmem:[%s263 + $0x2e0] sm:$0xff]
                  %358 = vst [vmem:[%s264 + $0x170] sm:$0xff] %v357
                  %v359 = vld [vmem:[%s263 + $0x2f0] sm:$0xff]
                  %360 = vst [vmem:[%s264 + $0x178] sm:$0xff] %v359
                  %v361 = vld [vmem:[%s263 + $0x300] sm:$0xff]
                  %362 = vst [vmem:[%s264 + $0x180] sm:$0xff] %v361
                  %v363 = vld [vmem:[%s263 + $0x310] sm:$0xff]
                  %364 = vst [vmem:[%s264 + $0x188] sm:$0xff] %v363
                  %v365 = vld [vmem:[%s263 + $0x320] sm:$0xff]
                  %366 = vst [vmem:[%s264 + $0x190] sm:$0xff] %v365
                  %v367 = vld [vmem:[%s263 + $0x330] sm:$0xff]
                  %368 = vst [vmem:[%s264 + $0x198] sm:$0xff] %v367
                  %v369 = vld [vmem:[%s263 + $0x340] sm:$0xff]
                  %370 = vst [vmem:[%s264 + $0x1a0] sm:$0xff] %v369
                  %v371 = vld [vmem:[%s263 + $0x350] sm:$0xff]
                  %372 = vst [vmem:[%s264 + $0x1a8] sm:$0xff] %v371
                  %v373 = vld [vmem:[%s263 + $0x360] sm:$0xff]
                  %374 = vst [vmem:[%s264 + $0x1b0] sm:$0xff] %v373
                  %v375 = vld [vmem:[%s263 + $0x370] sm:$0xff]
                  %376 = vst [vmem:[%s264 + $0x1b8] sm:$0xff] %v375
                  %v377 = vld [vmem:[%s263 + $0x380] sm:$0xff]
                  %378 = vst [vmem:[%s264 + $0x1c0] sm:$0xff] %v377
                  %v379 = vld [vmem:[%s263 + $0x390] sm:$0xff]
                  %380 = vst [vmem:[%s264 + $0x1c8] sm:$0xff] %v379
                  %v381 = vld [vmem:[%s263 + $0x3a0] sm:$0xff]
                  %382 = vst [vmem:[%s264 + $0x1d0] sm:$0xff] %v381
                  %v383 = vld [vmem:[%s263 + $0x3b0] sm:$0xff]
                  %384 = vst [vmem:[%s264 + $0x1d8] sm:$0xff] %v383
                  %v385 = vld [vmem:[%s263 + $0x3c0] sm:$0xff]
                  %386 = vst [vmem:[%s264 + $0x1e0] sm:$0xff] %v385
                  %v387 = vld [vmem:[%s263 + $0x3d0] sm:$0xff]
                  %388 = vst [vmem:[%s264 + $0x1e8] sm:$0xff] %v387
                  %v389 = vld [vmem:[%s263 + $0x3e0] sm:$0xff]
                  %390 = vst [vmem:[%s264 + $0x1f0] sm:$0xff] %v389
                  %v391 = vld [vmem:[%s263 + $0x3f0] sm:$0xff]
                  %392 = vst [vmem:[%s264 + $0x1f8] sm:$0xff] %v391
                $region52: #{tpu_custom_call.1} parent=46 // loop_footer
                  %s262 = sadd.s32 1, %s258
                $region53: #{tpu_custom_call.1} parent=46 // loop_footer_branch
                  %257 = sbr.rel target = $region49
                $region54: #{tpu_custom_call.1} parent=46 // loop_exit
                  _
              $region47: #{tpu_custom_call.1} parent=31 // pred_fallthru
                _
              // Predicated region
              $region55: #{tpu_custom_call.1} parent=31 // pred_check
                _
              $region56: #{tpu_custom_call.1} parent=31 // pred_check_branch
                %394 = sbr.rel target = $region58
              $region57: #{tpu_custom_call.1} parent=31 // pred_region
                _
              $region58: #{tpu_custom_call.1} parent=31 // pred_fallthru
                _
            $region32: #{tpu_custom_call.1} parent=27 // pred_fallthru
              _
            // Predicated region
            $region33: #{tpu_custom_call.1} parent=27 // pred_check
              _
            $region34: #{tpu_custom_call.1} parent=27 // pred_check_branch
              %117 = sbr.rel target = $region36
            $region35: #{tpu_custom_call.1} parent=27 // pred_region
              loop: start=0, step=1, limit=1
              $region37: #{tpu_custom_call.1} parent=35 // loop_pre_header
                _
              $region38: #{tpu_custom_call.1} parent=35 // loop_header
                %s120 = sphi 0, %s124
                %p121 = scmp.ge.s32.totalorder %s120, 1
                %s125 = sphi %s111, %s111
                %s126 = sphi %s109, %s109
              $region39: #{tpu_custom_call.1} parent=35 // loop_header_branch
                %123 = sbr.rel (%p121) target = $region43
              $region40: #{tpu_custom_call.1} parent=35 // loop_body
                %v127 = vld [vmem:[%s125] sm:$0xff]
                %128 = vst [vmem:[%s126] sm:$0xff] %v127
                %v129 = vld [vmem:[%s125 + $0x10] sm:$0xff]
                %130 = vst [vmem:[%s126 + $0x8] sm:$0xff] %v129
                %v131 = vld [vmem:[%s125 + $0x20] sm:$0xff]
                %132 = vst [vmem:[%s126 + $0x10] sm:$0xff] %v131
                %v133 = vld [vmem:[%s125 + $0x30] sm:$0xff]
                %134 = vst [vmem:[%s126 + $0x18] sm:$0xff] %v133
                %v135 = vld [vmem:[%s125 + $0x40] sm:$0xff]
                %136 = vst [vmem:[%s126 + $0x20] sm:$0xff] %v135
                %v137 = vld [vmem:[%s125 + $0x50] sm:$0xff]
                %138 = vst [vmem:[%s126 + $0x28] sm:$0xff] %v137
                %v139 = vld [vmem:[%s125 + $0x60] sm:$0xff]
                %140 = vst [vmem:[%s126 + $0x30] sm:$0xff] %v139
                %v141 = vld [vmem:[%s125 + $0x70] sm:$0xff]
                %142 = vst [vmem:[%s126 + $0x38] sm:$0xff] %v141
                %v143 = vld [vmem:[%s125 + $0x80] sm:$0xff]
                %144 = vst [vmem:[%s126 + $0x40] sm:$0xff] %v143
                %v145 = vld [vmem:[%s125 + $0x90] sm:$0xff]
                %146 = vst [vmem:[%s126 + $0x48] sm:$0xff] %v145
                %v147 = vld [vmem:[%s125 + $0xa0] sm:$0xff]
                %148 = vst [vmem:[%s126 + $0x50] sm:$0xff] %v147
                %v149 = vld [vmem:[%s125 + $0xb0] sm:$0xff]
                %150 = vst [vmem:[%s126 + $0x58] sm:$0xff] %v149
                %v151 = vld [vmem:[%s125 + $0xc0] sm:$0xff]
                %152 = vst [vmem:[%s126 + $0x60] sm:$0xff] %v151
                %v153 = vld [vmem:[%s125 + $0xd0] sm:$0xff]
                %154 = vst [vmem:[%s126 + $0x68] sm:$0xff] %v153
                %v155 = vld [vmem:[%s125 + $0xe0] sm:$0xff]
                %156 = vst [vmem:[%s126 + $0x70] sm:$0xff] %v155
                %v157 = vld [vmem:[%s125 + $0xf0] sm:$0xff]
                %158 = vst [vmem:[%s126 + $0x78] sm:$0xff] %v157
                %v159 = vld [vmem:[%s125 + $0x100] sm:$0xff]
                %160 = vst [vmem:[%s126 + $0x80] sm:$0xff] %v159
                %v161 = vld [vmem:[%s125 + $0x110] sm:$0xff]
                %162 = vst [vmem:[%s126 + $0x88] sm:$0xff] %v161
                %v163 = vld [vmem:[%s125 + $0x120] sm:$0xff]
                %164 = vst [vmem:[%s126 + $0x90] sm:$0xff] %v163
                %v165 = vld [vmem:[%s125 + $0x130] sm:$0xff]
                %166 = vst [vmem:[%s126 + $0x98] sm:$0xff] %v165
                %v167 = vld [vmem:[%s125 + $0x140] sm:$0xff]
                %168 = vst [vmem:[%s126 + $0xa0] sm:$0xff] %v167
                %v169 = vld [vmem:[%s125 + $0x150] sm:$0xff]
                %170 = vst [vmem:[%s126 + $0xa8] sm:$0xff] %v169
                %v171 = vld [vmem:[%s125 + $0x160] sm:$0xff]
                %172 = vst [vmem:[%s126 + $0xb0] sm:$0xff] %v171
                %v173 = vld [vmem:[%s125 + $0x170] sm:$0xff]
                %174 = vst [vmem:[%s126 + $0xb8] sm:$0xff] %v173
                %v175 = vld [vmem:[%s125 + $0x180] sm:$0xff]
                %176 = vst [vmem:[%s126 + $0xc0] sm:$0xff] %v175
                %v177 = vld [vmem:[%s125 + $0x190] sm:$0xff]
                %178 = vst [vmem:[%s126 + $0xc8] sm:$0xff] %v177
                %v179 = vld [vmem:[%s125 + $0x1a0] sm:$0xff]
                %180 = vst [vmem:[%s126 + $0xd0] sm:$0xff] %v179
                %v181 = vld [vmem:[%s125 + $0x1b0] sm:$0xff]
                %182 = vst [vmem:[%s126 + $0xd8] sm:$0xff] %v181
                %v183 = vld [vmem:[%s125 + $0x1c0] sm:$0xff]
                %184 = vst [vmem:[%s126 + $0xe0] sm:$0xff] %v183
                %v185 = vld [vmem:[%s125 + $0x1d0] sm:$0xff]
                %186 = vst [vmem:[%s126 + $0xe8] sm:$0xff] %v185
                %v187 = vld [vmem:[%s125 + $0x1e0] sm:$0xff]
                %188 = vst [vmem:[%s126 + $0xf0] sm:$0xff] %v187
                %v189 = vld [vmem:[%s125 + $0x1f0] sm:$0xff]
                %190 = vst [vmem:[%s126 + $0xf8] sm:$0xff] %v189
                %v191 = vld [vmem:[%s125 + $0x200] sm:$0xff]
                %192 = vst [vmem:[%s126 + $0x100] sm:$0xff] %v191
                %v193 = vld [vmem:[%s125 + $0x210] sm:$0xff]
                %194 = vst [vmem:[%s126 + $0x108] sm:$0xff] %v193
                %v195 = vld [vmem:[%s125 + $0x220] sm:$0xff]
                %196 = vst [vmem:[%s126 + $0x110] sm:$0xff] %v195
                %v197 = vld [vmem:[%s125 + $0x230] sm:$0xff]
                %198 = vst [vmem:[%s126 + $0x118] sm:$0xff] %v197
                %v199 = vld [vmem:[%s125 + $0x240] sm:$0xff]
                %200 = vst [vmem:[%s126 + $0x120] sm:$0xff] %v199
                %v201 = vld [vmem:[%s125 + $0x250] sm:$0xff]
                %202 = vst [vmem:[%s126 + $0x128] sm:$0xff] %v201
                %v203 = vld [vmem:[%s125 + $0x260] sm:$0xff]
                %204 = vst [vmem:[%s126 + $0x130] sm:$0xff] %v203
                %v205 = vld [vmem:[%s125 + $0x270] sm:$0xff]
                %206 = vst [vmem:[%s126 + $0x138] sm:$0xff] %v205
                %v207 = vld [vmem:[%s125 + $0x280] sm:$0xff]
                %208 = vst [vmem:[%s126 + $0x140] sm:$0xff] %v207
                %v209 = vld [vmem:[%s125 + $0x290] sm:$0xff]
                %210 = vst [vmem:[%s126 + $0x148] sm:$0xff] %v209
                %v211 = vld [vmem:[%s125 + $0x2a0] sm:$0xff]
                %212 = vst [vmem:[%s126 + $0x150] sm:$0xff] %v211
                %v213 = vld [vmem:[%s125 + $0x2b0] sm:$0xff]
                %214 = vst [vmem:[%s126 + $0x158] sm:$0xff] %v213
                %v215 = vld [vmem:[%s125 + $0x2c0] sm:$0xff]
                %216 = vst [vmem:[%s126 + $0x160] sm:$0xff] %v215
                %v217 = vld [vmem:[%s125 + $0x2d0] sm:$0xff]
                %218 = vst [vmem:[%s126 + $0x168] sm:$0xff] %v217
                %v219 = vld [vmem:[%s125 + $0x2e0] sm:$0xff]
                %220 = vst [vmem:[%s126 + $0x170] sm:$0xff] %v219
                %v221 = vld [vmem:[%s125 + $0x2f0] sm:$0xff]
                %222 = vst [vmem:[%s126 + $0x178] sm:$0xff] %v221
                %v223 = vld [vmem:[%s125 + $0x300] sm:$0xff]
                %224 = vst [vmem:[%s126 + $0x180] sm:$0xff] %v223
                %v225 = vld [vmem:[%s125 + $0x310] sm:$0xff]
                %226 = vst [vmem:[%s126 + $0x188] sm:$0xff] %v225
                %v227 = vld [vmem:[%s125 + $0x320] sm:$0xff]
                %228 = vst [vmem:[%s126 + $0x190] sm:$0xff] %v227
                %v229 = vld [vmem:[%s125 + $0x330] sm:$0xff]
                %230 = vst [vmem:[%s126 + $0x198] sm:$0xff] %v229
                %v231 = vld [vmem:[%s125 + $0x340] sm:$0xff]
                %232 = vst [vmem:[%s126 + $0x1a0] sm:$0xff] %v231
                %v233 = vld [vmem:[%s125 + $0x350] sm:$0xff]
                %234 = vst [vmem:[%s126 + $0x1a8] sm:$0xff] %v233
                %v235 = vld [vmem:[%s125 + $0x360] sm:$0xff]
                %236 = vst [vmem:[%s126 + $0x1b0] sm:$0xff] %v235
                %v237 = vld [vmem:[%s125 + $0x370] sm:$0xff]
                %238 = vst [vmem:[%s126 + $0x1b8] sm:$0xff] %v237
                %v239 = vld [vmem:[%s125 + $0x380] sm:$0xff]
                %240 = vst [vmem:[%s126 + $0x1c0] sm:$0xff] %v239
                %v241 = vld [vmem:[%s125 + $0x390] sm:$0xff]
                %242 = vst [vmem:[%s126 + $0x1c8] sm:$0xff] %v241
                %v243 = vld [vmem:[%s125 + $0x3a0] sm:$0xff]
                %244 = vst [vmem:[%s126 + $0x1d0] sm:$0xff] %v243
                %v245 = vld [vmem:[%s125 + $0x3b0] sm:$0xff]
                %246 = vst [vmem:[%s126 + $0x1d8] sm:$0xff] %v245
                %v247 = vld [vmem:[%s125 + $0x3c0] sm:$0xff]
                %248 = vst [vmem:[%s126 + $0x1e0] sm:$0xff] %v247
                %v249 = vld [vmem:[%s125 + $0x3d0] sm:$0xff]
                %250 = vst [vmem:[%s126 + $0x1e8] sm:$0xff] %v249
                %v251 = vld [vmem:[%s125 + $0x3e0] sm:$0xff]
                %252 = vst [vmem:[%s126 + $0x1f0] sm:$0xff] %v251
                %v253 = vld [vmem:[%s125 + $0x3f0] sm:$0xff]
                %254 = vst [vmem:[%s126 + $0x1f8] sm:$0xff] %v253
              $region41: #{tpu_custom_call.1} parent=35 // loop_footer
                %s124 = sadd.s32 1, %s120
              $region42: #{tpu_custom_call.1} parent=35 // loop_footer_branch
                %119 = sbr.rel target = $region38
              $region43: #{tpu_custom_call.1} parent=35 // loop_exit
                _
            $region36: #{tpu_custom_call.1} parent=27 // pred_fallthru
              _
          $region28: #{tpu_custom_call.1} parent=23 // pred_fallthru
            _
          %395 = vnop
        $region24: #{tpu_custom_call.1} parent=19 // pred_fallthru
          _
      $region20: #{tpu_custom_call.1} parent=5 // pred_fallthru
        _
      %p396 = scmp.le.s32.totalorder 1, %s8
      %p397 = scmp.lt.s32.totalorder %s8, 3
      %p398 = pnand %p396, %p397
      %p399 = pneg %p398
      // Predicated region
      $region59: #{tpu_custom_call.1} parent=5 // pred_check
        _
      $region60: #{tpu_custom_call.1} parent=5 // pred_check_branch
        %401 = sbr.rel (%p398) target = $region62
      $region61: #{tpu_custom_call.1} parent=5 // pred_region
        %s402 = ssub.s32 %s8, 1
        %s403 = sand.u32 %s21, 1
        %s404 = sand.u32 %s21, 1
        %s405 = smul.addr %s404, 512
        %s406 = scalar_lea.vmem [#allocation2], %s405
        // Predicated region
        $region63: #{tpu_custom_call.1} parent=61 // pred_check
          %p407 = pneg %p34
        $region64: #{tpu_custom_call.1} parent=61 // pred_check_branch
          %409 = sbr.rel (%p407) target = $region66
        $region65: #{tpu_custom_call.1} parent=61 // pred_region
          _
        $region66: #{tpu_custom_call.1} parent=61 // pred_fallthru
          _
        %s410 = sand.u32 %s21, 1
        %s411 = sand.u32 %s21, 1
        %s412 = smul.addr %s411, 512
        %s413 = scalar_lea.vmem [#allocation2], %s412
        %p414 = pneg %p34
        %p415 = pneg %p31
        %p416 = pneg %p55
        %p417 = pneg %p52
        %p418 = pneg %p81
        %p419 = pneg %p78
        %s420 = sand.u32 %s68, 1
        %s421 = sand.u32 %s68, 1
        %s422 = smul.addr %s421, 1024
        %s423 = scalar_lea.vmem [#allocation3], %s422
        %v424 = vld [vmem:[%s406] sm:$0xff]
        %v425 = vld [vmem:[%s406 + $0x8] sm:$0xff]
        %v426 = vld [vmem:[%s406 + $0x10] sm:$0xff]
        %v427 = vld [vmem:[%s406 + $0x18] sm:$0xff]
        %v428 = vld [vmem:[%s406 + $0x20] sm:$0xff]
        %v429 = vld [vmem:[%s406 + $0x28] sm:$0xff]
        %v430 = vld [vmem:[%s406 + $0x30] sm:$0xff]
        %v431 = vld [vmem:[%s406 + $0x38] sm:$0xff]
        %v432 = vld [vmem:[%s406 + $0x40] sm:$0xff]
        %v433 = vld [vmem:[%s406 + $0x48] sm:$0xff]
        %v434 = vld [vmem:[%s406 + $0x50] sm:$0xff]
        %v435 = vld [vmem:[%s406 + $0x58] sm:$0xff]
        %v436 = vld [vmem:[%s406 + $0x60] sm:$0xff]
        %v437 = vld [vmem:[%s406 + $0x68] sm:$0xff]
        %v438 = vld [vmem:[%s406 + $0x70] sm:$0xff]
        %v439 = vld [vmem:[%s406 + $0x78] sm:$0xff]
        %v440 = vld [vmem:[%s406 + $0x80] sm:$0xff]
        %v441 = vld [vmem:[%s406 + $0x88] sm:$0xff]
        %v442 = vld [vmem:[%s406 + $0x90] sm:$0xff]
        %v443 = vld [vmem:[%s406 + $0x98] sm:$0xff]
        %v444 = vld [vmem:[%s406 + $0xa0] sm:$0xff]
        %v445 = vld [vmem:[%s406 + $0xa8] sm:$0xff]
        %v446 = vld [vmem:[%s406 + $0xb0] sm:$0xff]
        %v447 = vld [vmem:[%s406 + $0xb8] sm:$0xff]
        %v448 = vld [vmem:[%s406 + $0xc0] sm:$0xff]
        %v449 = vld [vmem:[%s406 + $0xc8] sm:$0xff]
        %v450 = vld [vmem:[%s406 + $0xd0] sm:$0xff]
        %v451 = vld [vmem:[%s406 + $0xd8] sm:$0xff]
        %v452 = vld [vmem:[%s406 + $0xe0] sm:$0xff]
        %v453 = vld [vmem:[%s406 + $0xe8] sm:$0xff]
        %v454 = vld [vmem:[%s406 + $0xf0] sm:$0xff]
        %v455 = vld [vmem:[%s406 + $0xf8] sm:$0xff]
        %v456 = vld [vmem:[%s406 + $0x100] sm:$0xff]
        %v457 = vld [vmem:[%s406 + $0x108] sm:$0xff]
        %v458 = vld [vmem:[%s406 + $0x110] sm:$0xff]
        %v459 = vld [vmem:[%s406 + $0x118] sm:$0xff]
        %v460 = vld [vmem:[%s406 + $0x120] sm:$0xff]
        %v461 = vld [vmem:[%s406 + $0x128] sm:$0xff]
        %v462 = vld [vmem:[%s406 + $0x130] sm:$0xff]
        %v463 = vld [vmem:[%s406 + $0x138] sm:$0xff]
        %v464 = vld [vmem:[%s406 + $0x140] sm:$0xff]
        %v465 = vld [vmem:[%s406 + $0x148] sm:$0xff]
        %v466 = vld [vmem:[%s406 + $0x150] sm:$0xff]
        %v467 = vld [vmem:[%s406 + $0x158] sm:$0xff]
        %v468 = vld [vmem:[%s406 + $0x160] sm:$0xff]
        %v469 = vld [vmem:[%s406 + $0x168] sm:$0xff]
        %v470 = vld [vmem:[%s406 + $0x170] sm:$0xff]
        %v471 = vld [vmem:[%s406 + $0x178] sm:$0xff]
        %v472 = vld [vmem:[%s406 + $0x180] sm:$0xff]
        %v473 = vld [vmem:[%s406 + $0x188] sm:$0xff]
        %v474 = vld [vmem:[%s406 + $0x190] sm:$0xff]
        %v475 = vld [vmem:[%s406 + $0x198] sm:$0xff]
        %v476 = vld [vmem:[%s406 + $0x1a0] sm:$0xff]
        %v477 = vld [vmem:[%s406 + $0x1a8] sm:$0xff]
        %v478 = vld [vmem:[%s406 + $0x1b0] sm:$0xff]
        %v479 = vld [vmem:[%s406 + $0x1b8] sm:$0xff]
        %v480 = vld [vmem:[%s406 + $0x1c0] sm:$0xff]
        %v481 = vld [vmem:[%s406 + $0x1c8] sm:$0xff]
        %v482 = vld [vmem:[%s406 + $0x1d0] sm:$0xff]
        %v483 = vld [vmem:[%s406 + $0x1d8] sm:$0xff]
        %v484 = vld [vmem:[%s406 + $0x1e0] sm:$0xff]
        %v485 = vld [vmem:[%s406 + $0x1e8] sm:$0xff]
        %v486 = vld [vmem:[%s406 + $0x1f0] sm:$0xff]
        %v487 = vld [vmem:[%s406 + $0x1f8] sm:$0xff]
        %489 = vset.pattern.permute.xlu0 0
        %490 = vperm.xlu0 %489, %v424
        %v491 = vpop.permute.xlu0 %490
        %494 = vset.pattern.permute.xlu0 0
        %495 = vperm.xlu0 %494, %v425
        %v496 = vpop.permute.xlu0 %495
        %499 = vset.pattern.permute.xlu0 0
        %500 = vperm.xlu0 %499, %v426
        %v501 = vpop.permute.xlu0 %500
        %504 = vset.pattern.permute.xlu0 0
        %505 = vperm.xlu0 %504, %v427
        %v506 = vpop.permute.xlu0 %505
        %509 = vset.pattern.permute.xlu0 0
        %510 = vperm.xlu0 %509, %v428
        %v511 = vpop.permute.xlu0 %510
        %514 = vset.pattern.permute.xlu0 0
        %515 = vperm.xlu0 %514, %v429
        %v516 = vpop.permute.xlu0 %515
        %519 = vset.pattern.permute.xlu0 0
        %520 = vperm.xlu0 %519, %v430
        %v521 = vpop.permute.xlu0 %520
        %524 = vset.pattern.permute.xlu0 0
        %525 = vperm.xlu0 %524, %v431
        %v526 = vpop.permute.xlu0 %525
        %529 = vset.pattern.permute.xlu0 0
        %530 = vperm.xlu0 %529, %v432
        %v531 = vpop.permute.xlu0 %530
        %534 = vset.pattern.permute.xlu0 0
        %535 = vperm.xlu0 %534, %v433
        %v536 = vpop.permute.xlu0 %535
        %539 = vset.pattern.permute.xlu0 0
        %540 = vperm.xlu0 %539, %v434
        %v541 = vpop.permute.xlu0 %540
        %544 = vset.pattern.permute.xlu0 0
        %545 = vperm.xlu0 %544, %v435
        %v546 = vpop.permute.xlu0 %545
        %549 = vset.pattern.permute.xlu0 0
        %550 = vperm.xlu0 %549, %v436
        %v551 = vpop.permute.xlu0 %550
        %554 = vset.pattern.permute.xlu0 0
        %555 = vperm.xlu0 %554, %v437
        %v556 = vpop.permute.xlu0 %555
        %559 = vset.pattern.permute.xlu0 0
        %560 = vperm.xlu0 %559, %v438
        %v561 = vpop.permute.xlu0 %560
        %564 = vset.pattern.permute.xlu0 0
        %565 = vperm.xlu0 %564, %v439
        %v566 = vpop.permute.xlu0 %565
        %569 = vset.pattern.permute.xlu0 0
        %570 = vperm.xlu0 %569, %v440
        %v571 = vpop.permute.xlu0 %570
        %574 = vset.pattern.permute.xlu0 0
        %575 = vperm.xlu0 %574, %v441
        %v576 = vpop.permute.xlu0 %575
        %579 = vset.pattern.permute.xlu0 0
        %580 = vperm.xlu0 %579, %v442
        %v581 = vpop.permute.xlu0 %580
        %584 = vset.pattern.permute.xlu0 0
        %585 = vperm.xlu0 %584, %v443
        %v586 = vpop.permute.xlu0 %585
        %589 = vset.pattern.permute.xlu0 0
        %590 = vperm.xlu0 %589, %v444
        %v591 = vpop.permute.xlu0 %590
        %594 = vset.pattern.permute.xlu0 0
        %595 = vperm.xlu0 %594, %v445
        %v596 = vpop.permute.xlu0 %595
        %599 = vset.pattern.permute.xlu0 0
        %600 = vperm.xlu0 %599, %v446
        %v601 = vpop.permute.xlu0 %600
        %604 = vset.pattern.permute.xlu0 0
        %605 = vperm.xlu0 %604, %v447
        %v606 = vpop.permute.xlu0 %605
        %609 = vset.pattern.permute.xlu0 0
        %610 = vperm.xlu0 %609, %v448
        %v611 = vpop.permute.xlu0 %610
        %614 = vset.pattern.permute.xlu0 0
        %615 = vperm.xlu0 %614, %v449
        %v616 = vpop.permute.xlu0 %615
        %619 = vset.pattern.permute.xlu0 0
        %620 = vperm.xlu0 %619, %v450
        %v621 = vpop.permute.xlu0 %620
        %624 = vset.pattern.permute.xlu0 0
        %625 = vperm.xlu0 %624, %v451
        %v626 = vpop.permute.xlu0 %625
        %629 = vset.pattern.permute.xlu0 0
        %630 = vperm.xlu0 %629, %v452
        %v631 = vpop.permute.xlu0 %630
        %634 = vset.pattern.permute.xlu0 0
        %635 = vperm.xlu0 %634, %v453
        %v636 = vpop.permute.xlu0 %635
        %639 = vset.pattern.permute.xlu0 0
        %640 = vperm.xlu0 %639, %v454
        %v641 = vpop.permute.xlu0 %640
        %644 = vset.pattern.permute.xlu0 0
        %645 = vperm.xlu0 %644, %v455
        %v646 = vpop.permute.xlu0 %645
        %649 = vset.pattern.permute.xlu0 0
        %650 = vperm.xlu0 %649, %v456
        %v651 = vpop.permute.xlu0 %650
        %654 = vset.pattern.permute.xlu0 0
        %655 = vperm.xlu0 %654, %v457
        %v656 = vpop.permute.xlu0 %655
        %659 = vset.pattern.permute.xlu0 0
        %660 = vperm.xlu0 %659, %v458
        %v661 = vpop.permute.xlu0 %660
        %664 = vset.pattern.permute.xlu0 0
        %665 = vperm.xlu0 %664, %v459
        %v666 = vpop.permute.xlu0 %665
        %669 = vset.pattern.permute.xlu0 0
        %670 = vperm.xlu0 %669, %v460
        %v671 = vpop.permute.xlu0 %670
        %674 = vset.pattern.permute.xlu0 0
        %675 = vperm.xlu0 %674, %v461
        %v676 = vpop.permute.xlu0 %675
        %679 = vset.pattern.permute.xlu0 0
        %680 = vperm.xlu0 %679, %v462
        %v681 = vpop.permute.xlu0 %680
        %684 = vset.pattern.permute.xlu0 0
        %685 = vperm.xlu0 %684, %v463
        %v686 = vpop.permute.xlu0 %685
        %689 = vset.pattern.permute.xlu0 0
        %690 = vperm.xlu0 %689, %v464
        %v691 = vpop.permute.xlu0 %690
        %694 = vset.pattern.permute.xlu0 0
        %695 = vperm.xlu0 %694, %v465
        %v696 = vpop.permute.xlu0 %695
        %699 = vset.pattern.permute.xlu0 0
        %700 = vperm.xlu0 %699, %v466
        %v701 = vpop.permute.xlu0 %700
        %704 = vset.pattern.permute.xlu0 0
        %705 = vperm.xlu0 %704, %v467
        %v706 = vpop.permute.xlu0 %705
        %709 = vset.pattern.permute.xlu0 0
        %710 = vperm.xlu0 %709, %v468
        %v711 = vpop.permute.xlu0 %710
        %714 = vset.pattern.permute.xlu0 0
        %715 = vperm.xlu0 %714, %v469
        %v716 = vpop.permute.xlu0 %715
        %719 = vset.pattern.permute.xlu0 0
        %720 = vperm.xlu0 %719, %v470
        %v721 = vpop.permute.xlu0 %720
        %724 = vset.pattern.permute.xlu0 0
        %725 = vperm.xlu0 %724, %v471
        %v726 = vpop.permute.xlu0 %725
        %729 = vset.pattern.permute.xlu0 0
        %730 = vperm.xlu0 %729, %v472
        %v731 = vpop.permute.xlu0 %730
        %734 = vset.pattern.permute.xlu0 0
        %735 = vperm.xlu0 %734, %v473
        %v736 = vpop.permute.xlu0 %735
        %739 = vset.pattern.permute.xlu0 0
        %740 = vperm.xlu0 %739, %v474
        %v741 = vpop.permute.xlu0 %740
        %744 = vset.pattern.permute.xlu0 0
        %745 = vperm.xlu0 %744, %v475
        %v746 = vpop.permute.xlu0 %745
        %749 = vset.pattern.permute.xlu0 0
        %750 = vperm.xlu0 %749, %v476
        %v751 = vpop.permute.xlu0 %750
        %754 = vset.pattern.permute.xlu0 0
        %755 = vperm.xlu0 %754, %v477
        %v756 = vpop.permute.xlu0 %755
        %759 = vset.pattern.permute.xlu0 0
        %760 = vperm.xlu0 %759, %v478
        %v761 = vpop.permute.xlu0 %760
        %764 = vset.pattern.permute.xlu0 0
        %765 = vperm.xlu0 %764, %v479
        %v766 = vpop.permute.xlu0 %765
        %769 = vset.pattern.permute.xlu0 0
        %770 = vperm.xlu0 %769, %v480
        %v771 = vpop.permute.xlu0 %770
        %774 = vset.pattern.permute.xlu0 0
        %775 = vperm.xlu0 %774, %v481
        %v776 = vpop.permute.xlu0 %775
        %779 = vset.pattern.permute.xlu0 0
        %780 = vperm.xlu0 %779, %v482
        %v781 = vpop.permute.xlu0 %780
        %784 = vset.pattern.permute.xlu0 0
        %785 = vperm.xlu0 %784, %v483
        %v786 = vpop.permute.xlu0 %785
        %789 = vset.pattern.permute.xlu0 0
        %790 = vperm.xlu0 %789, %v484
        %v791 = vpop.permute.xlu0 %790
        %794 = vset.pattern.permute.xlu0 0
        %795 = vperm.xlu0 %794, %v485
        %v796 = vpop.permute.xlu0 %795
        %799 = vset.pattern.permute.xlu0 0
        %800 = vperm.xlu0 %799, %v486
        %v801 = vpop.permute.xlu0 %800
        %804 = vset.pattern.permute.xlu0 0
        %805 = vperm.xlu0 %804, %v487
        %v806 = vpop.permute.xlu0 %805
        %v808 = vld [vmem:[%s1] sm:$0x1]
        %v809 = vld [vmem:[%s1 + $0x1] sm:$0x1]
        %v810 = vld [vmem:[%s1 + $0x2] sm:$0x1]
        %v811 = vld [vmem:[%s1 + $0x3] sm:$0x1]
        %v812 = vld [vmem:[%s1 + $0x4] sm:$0x1]
        %v813 = vld [vmem:[%s1 + $0x5] sm:$0x1]
        %v814 = vld [vmem:[%s1 + $0x6] sm:$0x1]
        %v815 = vld [vmem:[%s1 + $0x7] sm:$0x1]
        %v816 = vld [vmem:[%s1 + $0x8] sm:$0x1]
        %v817 = vld [vmem:[%s1 + $0x9] sm:$0x1]
        %v818 = vld [vmem:[%s1 + $0xa] sm:$0x1]
        %v819 = vld [vmem:[%s1 + $0xb] sm:$0x1]
        %v820 = vld [vmem:[%s1 + $0xc] sm:$0x1]
        %v821 = vld [vmem:[%s1 + $0xd] sm:$0x1]
        %v822 = vld [vmem:[%s1 + $0xe] sm:$0x1]
        %v823 = vld [vmem:[%s1 + $0xf] sm:$0x1]
        %v824 = vld [vmem:[%s1 + $0x10] sm:$0x1]
        %v825 = vld [vmem:[%s1 + $0x11] sm:$0x1]
        %v826 = vld [vmem:[%s1 + $0x12] sm:$0x1]
        %v827 = vld [vmem:[%s1 + $0x13] sm:$0x1]
        %v828 = vld [vmem:[%s1 + $0x14] sm:$0x1]
        %v829 = vld [vmem:[%s1 + $0x15] sm:$0x1]
        %v830 = vld [vmem:[%s1 + $0x16] sm:$0x1]
        %v831 = vld [vmem:[%s1 + $0x17] sm:$0x1]
        %v832 = vld [vmem:[%s1 + $0x18] sm:$0x1]
        %v833 = vld [vmem:[%s1 + $0x19] sm:$0x1]
        %v834 = vld [vmem:[%s1 + $0x1a] sm:$0x1]
        %v835 = vld [vmem:[%s1 + $0x1b] sm:$0x1]
        %v836 = vld [vmem:[%s1 + $0x1c] sm:$0x1]
        %v837 = vld [vmem:[%s1 + $0x1d] sm:$0x1]
        %v838 = vld [vmem:[%s1 + $0x1e] sm:$0x1]
        %v839 = vld [vmem:[%s1 + $0x1f] sm:$0x1]
        %v840 = vld [vmem:[%s1 + $0x20] sm:$0x1]
        %v841 = vld [vmem:[%s1 + $0x21] sm:$0x1]
        %v842 = vld [vmem:[%s1 + $0x22] sm:$0x1]
        %v843 = vld [vmem:[%s1 + $0x23] sm:$0x1]
        %v844 = vld [vmem:[%s1 + $0x24] sm:$0x1]
        %v845 = vld [vmem:[%s1 + $0x25] sm:$0x1]
        %v846 = vld [vmem:[%s1 + $0x26] sm:$0x1]
        %v847 = vld [vmem:[%s1 + $0x27] sm:$0x1]
        %v848 = vld [vmem:[%s1 + $0x28] sm:$0x1]
        %v849 = vld [vmem:[%s1 + $0x29] sm:$0x1]
        %v850 = vld [vmem:[%s1 + $0x2a] sm:$0x1]
        %v851 = vld [vmem:[%s1 + $0x2b] sm:$0x1]
        %v852 = vld [vmem:[%s1 + $0x2c] sm:$0x1]
        %v853 = vld [vmem:[%s1 + $0x2d] sm:$0x1]
        %v854 = vld [vmem:[%s1 + $0x2e] sm:$0x1]
        %v855 = vld [vmem:[%s1 + $0x2f] sm:$0x1]
        %v856 = vld [vmem:[%s1 + $0x30] sm:$0x1]
        %v857 = vld [vmem:[%s1 + $0x31] sm:$0x1]
        %v858 = vld [vmem:[%s1 + $0x32] sm:$0x1]
        %v859 = vld [vmem:[%s1 + $0x33] sm:$0x1]
        %v860 = vld [vmem:[%s1 + $0x34] sm:$0x1]
        %v861 = vld [vmem:[%s1 + $0x35] sm:$0x1]
        %v862 = vld [vmem:[%s1 + $0x36] sm:$0x1]
        %v863 = vld [vmem:[%s1 + $0x37] sm:$0x1]
        %v864 = vld [vmem:[%s1 + $0x38] sm:$0x1]
        %v865 = vld [vmem:[%s1 + $0x39] sm:$0x1]
        %v866 = vld [vmem:[%s1 + $0x3a] sm:$0x1]
        %v867 = vld [vmem:[%s1 + $0x3b] sm:$0x1]
        %v868 = vld [vmem:[%s1 + $0x3c] sm:$0x1]
        %v869 = vld [vmem:[%s1 + $0x3d] sm:$0x1]
        %v870 = vld [vmem:[%s1 + $0x3e] sm:$0x1]
        %v871 = vld [vmem:[%s1 + $0x3f] sm:$0x1]
        %v936 = vlaneseq
        %v937 = vshrl.u32 %v936, 7
        %v938 = vsub.s32 0, %v937
        %v939 = vrot.slane %v808, %v938
        %v940 = vlaneseq
        %v941 = vshrl.u32 %v940, 7
        %v942 = vsub.s32 0, %v941
        %v943 = vrot.slane %v809, %v942
        %v944 = vlaneseq
        %v945 = vshrl.u32 %v944, 7
        %v946 = vsub.s32 0, %v945
        %v947 = vrot.slane %v810, %v946
        %v948 = vlaneseq
        %v949 = vshrl.u32 %v948, 7
        %v950 = vsub.s32 0, %v949
        %v951 = vrot.slane %v811, %v950
        %v952 = vlaneseq
        %v953 = vshrl.u32 %v952, 7
        %v954 = vsub.s32 0, %v953
        %v955 = vrot.slane %v812, %v954
        %v956 = vlaneseq
        %v957 = vshrl.u32 %v956, 7
        %v958 = vsub.s32 0, %v957
        %v959 = vrot.slane %v813, %v958
        %v960 = vlaneseq
        %v961 = vshrl.u32 %v960, 7
        %v962 = vsub.s32 0, %v961
        %v963 = vrot.slane %v814, %v962
        %v964 = vlaneseq
        %v965 = vshrl.u32 %v964, 7
        %v966 = vsub.s32 0, %v965
        %v967 = vrot.slane %v815, %v966
        %v968 = vlaneseq
        %v969 = vshrl.u32 %v968, 7
        %v970 = vsub.s32 0, %v969
        %v971 = vrot.slane %v816, %v970
        %v972 = vlaneseq
        %v973 = vshrl.u32 %v972, 7
        %v974 = vsub.s32 0, %v973
        %v975 = vrot.slane %v817, %v974
        %v976 = vlaneseq
        %v977 = vshrl.u32 %v976, 7
        %v978 = vsub.s32 0, %v977
        %v979 = vrot.slane %v818, %v978
        %v980 = vlaneseq
        %v981 = vshrl.u32 %v980, 7
        %v982 = vsub.s32 0, %v981
        %v983 = vrot.slane %v819, %v982
        %v984 = vlaneseq
        %v985 = vshrl.u32 %v984, 7
        %v986 = vsub.s32 0, %v985
        %v987 = vrot.slane %v820, %v986
        %v988 = vlaneseq
        %v989 = vshrl.u32 %v988, 7
        %v990 = vsub.s32 0, %v989
        %v991 = vrot.slane %v821, %v990
        %v992 = vlaneseq
        %v993 = vshrl.u32 %v992, 7
        %v994 = vsub.s32 0, %v993
        %v995 = vrot.slane %v822, %v994
        %v996 = vlaneseq
        %v997 = vshrl.u32 %v996, 7
        %v998 = vsub.s32 0, %v997
        %v999 = vrot.slane %v823, %v998
        %v1000 = vlaneseq
        %v1001 = vshrl.u32 %v1000, 7
        %v1002 = vsub.s32 0, %v1001
        %v1003 = vrot.slane %v824, %v1002
        %v1004 = vlaneseq
        %v1005 = vshrl.u32 %v1004, 7
        %v1006 = vsub.s32 0, %v1005
        %v1007 = vrot.slane %v825, %v1006
        %v1008 = vlaneseq
        %v1009 = vshrl.u32 %v1008, 7
        %v1010 = vsub.s32 0, %v1009
        %v1011 = vrot.slane %v826, %v1010
        %v1012 = vlaneseq
        %v1013 = vshrl.u32 %v1012, 7
        %v1014 = vsub.s32 0, %v1013
        %v1015 = vrot.slane %v827, %v1014
        %v1016 = vlaneseq
        %v1017 = vshrl.u32 %v1016, 7
        %v1018 = vsub.s32 0, %v1017
        %v1019 = vrot.slane %v828, %v1018
        %v1020 = vlaneseq
        %v1021 = vshrl.u32 %v1020, 7
        %v1022 = vsub.s32 0, %v1021
        %v1023 = vrot.slane %v829, %v1022
        %v1024 = vlaneseq
        %v1025 = vshrl.u32 %v1024, 7
        %v1026 = vsub.s32 0, %v1025
        %v1027 = vrot.slane %v830, %v1026
        %v1028 = vlaneseq
        %v1029 = vshrl.u32 %v1028, 7
        %v1030 = vsub.s32 0, %v1029
        %v1031 = vrot.slane %v831, %v1030
        %v1032 = vlaneseq
        %v1033 = vshrl.u32 %v1032, 7
        %v1034 = vsub.s32 0, %v1033
        %v1035 = vrot.slane %v832, %v1034
        %v1036 = vlaneseq
        %v1037 = vshrl.u32 %v1036, 7
        %v1038 = vsub.s32 0, %v1037
        %v1039 = vrot.slane %v833, %v1038
        %v1040 = vlaneseq
        %v1041 = vshrl.u32 %v1040, 7
        %v1042 = vsub.s32 0, %v1041
        %v1043 = vrot.slane %v834, %v1042
        %v1044 = vlaneseq
        %v1045 = vshrl.u32 %v1044, 7
        %v1046 = vsub.s32 0, %v1045
        %v1047 = vrot.slane %v835, %v1046
        %v1048 = vlaneseq
        %v1049 = vshrl.u32 %v1048, 7
        %v1050 = vsub.s32 0, %v1049
        %v1051 = vrot.slane %v836, %v1050
        %v1052 = vlaneseq
        %v1053 = vshrl.u32 %v1052, 7
        %v1054 = vsub.s32 0, %v1053
        %v1055 = vrot.slane %v837, %v1054
        %v1056 = vlaneseq
        %v1057 = vshrl.u32 %v1056, 7
        %v1058 = vsub.s32 0, %v1057
        %v1059 = vrot.slane %v838, %v1058
        %v1060 = vlaneseq
        %v1061 = vshrl.u32 %v1060, 7
        %v1062 = vsub.s32 0, %v1061
        %v1063 = vrot.slane %v839, %v1062
        %v1064 = vlaneseq
        %v1065 = vshrl.u32 %v1064, 7
        %v1066 = vsub.s32 0, %v1065
        %v1067 = vrot.slane %v840, %v1066
        %v1068 = vlaneseq
        %v1069 = vshrl.u32 %v1068, 7
        %v1070 = vsub.s32 0, %v1069
        %v1071 = vrot.slane %v841, %v1070
        %v1072 = vlaneseq
        %v1073 = vshrl.u32 %v1072, 7
        %v1074 = vsub.s32 0, %v1073
        %v1075 = vrot.slane %v842, %v1074
        %v1076 = vlaneseq
        %v1077 = vshrl.u32 %v1076, 7
        %v1078 = vsub.s32 0, %v1077
        %v1079 = vrot.slane %v843, %v1078
        %v1080 = vlaneseq
        %v1081 = vshrl.u32 %v1080, 7
        %v1082 = vsub.s32 0, %v1081
        %v1083 = vrot.slane %v844, %v1082
        %v1084 = vlaneseq
        %v1085 = vshrl.u32 %v1084, 7
        %v1086 = vsub.s32 0, %v1085
        %v1087 = vrot.slane %v845, %v1086
        %v1088 = vlaneseq
        %v1089 = vshrl.u32 %v1088, 7
        %v1090 = vsub.s32 0, %v1089
        %v1091 = vrot.slane %v846, %v1090
        %v1092 = vlaneseq
        %v1093 = vshrl.u32 %v1092, 7
        %v1094 = vsub.s32 0, %v1093
        %v1095 = vrot.slane %v847, %v1094
        %v1096 = vlaneseq
        %v1097 = vshrl.u32 %v1096, 7
        %v1098 = vsub.s32 0, %v1097
        %v1099 = vrot.slane %v848, %v1098
        %v1100 = vlaneseq
        %v1101 = vshrl.u32 %v1100, 7
        %v1102 = vsub.s32 0, %v1101
        %v1103 = vrot.slane %v849, %v1102
        %v1104 = vlaneseq
        %v1105 = vshrl.u32 %v1104, 7
        %v1106 = vsub.s32 0, %v1105
        %v1107 = vrot.slane %v850, %v1106
        %v1108 = vlaneseq
        %v1109 = vshrl.u32 %v1108, 7
        %v1110 = vsub.s32 0, %v1109
        %v1111 = vrot.slane %v851, %v1110
        %v1112 = vlaneseq
        %v1113 = vshrl.u32 %v1112, 7
        %v1114 = vsub.s32 0, %v1113
        %v1115 = vrot.slane %v852, %v1114
        %v1116 = vlaneseq
        %v1117 = vshrl.u32 %v1116, 7
        %v1118 = vsub.s32 0, %v1117
        %v1119 = vrot.slane %v853, %v1118
        %v1120 = vlaneseq
        %v1121 = vshrl.u32 %v1120, 7
        %v1122 = vsub.s32 0, %v1121
        %v1123 = vrot.slane %v854, %v1122
        %v1124 = vlaneseq
        %v1125 = vshrl.u32 %v1124, 7
        %v1126 = vsub.s32 0, %v1125
        %v1127 = vrot.slane %v855, %v1126
        %v1128 = vlaneseq
        %v1129 = vshrl.u32 %v1128, 7
        %v1130 = vsub.s32 0, %v1129
        %v1131 = vrot.slane %v856, %v1130
        %v1132 = vlaneseq
        %v1133 = vshrl.u32 %v1132, 7
        %v1134 = vsub.s32 0, %v1133
        %v1135 = vrot.slane %v857, %v1134
        %v1136 = vlaneseq
        %v1137 = vshrl.u32 %v1136, 7
        %v1138 = vsub.s32 0, %v1137
        %v1139 = vrot.slane %v858, %v1138
        %v1140 = vlaneseq
        %v1141 = vshrl.u32 %v1140, 7
        %v1142 = vsub.s32 0, %v1141
        %v1143 = vrot.slane %v859, %v1142
        %v1144 = vlaneseq
        %v1145 = vshrl.u32 %v1144, 7
        %v1146 = vsub.s32 0, %v1145
        %v1147 = vrot.slane %v860, %v1146
        %v1148 = vlaneseq
        %v1149 = vshrl.u32 %v1148, 7
        %v1150 = vsub.s32 0, %v1149
        %v1151 = vrot.slane %v861, %v1150
        %v1152 = vlaneseq
        %v1153 = vshrl.u32 %v1152, 7
        %v1154 = vsub.s32 0, %v1153
        %v1155 = vrot.slane %v862, %v1154
        %v1156 = vlaneseq
        %v1157 = vshrl.u32 %v1156, 7
        %v1158 = vsub.s32 0, %v1157
        %v1159 = vrot.slane %v863, %v1158
        %v1160 = vlaneseq
        %v1161 = vshrl.u32 %v1160, 7
        %v1162 = vsub.s32 0, %v1161
        %v1163 = vrot.slane %v864, %v1162
        %v1164 = vlaneseq
        %v1165 = vshrl.u32 %v1164, 7
        %v1166 = vsub.s32 0, %v1165
        %v1167 = vrot.slane %v865, %v1166
        %v1168 = vlaneseq
        %v1169 = vshrl.u32 %v1168, 7
        %v1170 = vsub.s32 0, %v1169
        %v1171 = vrot.slane %v866, %v1170
        %v1172 = vlaneseq
        %v1173 = vshrl.u32 %v1172, 7
        %v1174 = vsub.s32 0, %v1173
        %v1175 = vrot.slane %v867, %v1174
        %v1176 = vlaneseq
        %v1177 = vshrl.u32 %v1176, 7
        %v1178 = vsub.s32 0, %v1177
        %v1179 = vrot.slane %v868, %v1178
        %v1180 = vlaneseq
        %v1181 = vshrl.u32 %v1180, 7
        %v1182 = vsub.s32 0, %v1181
        %v1183 = vrot.slane %v869, %v1182
        %v1184 = vlaneseq
        %v1185 = vshrl.u32 %v1184, 7
        %v1186 = vsub.s32 0, %v1185
        %v1187 = vrot.slane %v870, %v1186
        %v1188 = vlaneseq
        %v1189 = vshrl.u32 %v1188, 7
        %v1190 = vsub.s32 0, %v1189
        %v1191 = vrot.slane %v871, %v1190
        %vm1256 = vcmask 130048
        %1257 = vst.msk [vmem:[%s423] sm:$0xff] %vm1256, %v491
        %1258 = vst.msk [vmem:[%s423 + $0x8] sm:$0xff] %vm1256, %v496
        %1259 = vst.msk [vmem:[%s423 + $0x10] sm:$0xff] %vm1256, %v501
        %1260 = vst.msk [vmem:[%s423 + $0x18] sm:$0xff] %vm1256, %v506
        %1261 = vst.msk [vmem:[%s423 + $0x20] sm:$0xff] %vm1256, %v511
        %1262 = vst.msk [vmem:[%s423 + $0x28] sm:$0xff] %vm1256, %v516
        %1263 = vst.msk [vmem:[%s423 + $0x30] sm:$0xff] %vm1256, %v521
        %1264 = vst.msk [vmem:[%s423 + $0x38] sm:$0xff] %vm1256, %v526
        %1265 = vst.msk [vmem:[%s423 + $0x40] sm:$0xff] %vm1256, %v531
        %1266 = vst.msk [vmem:[%s423 + $0x48] sm:$0xff] %vm1256, %v536
        %1267 = vst.msk [vmem:[%s423 + $0x50] sm:$0xff] %vm1256, %v541
        %1268 = vst.msk [vmem:[%s423 + $0x58] sm:$0xff] %vm1256, %v546
        %1269 = vst.msk [vmem:[%s423 + $0x60] sm:$0xff] %vm1256, %v551
        %1270 = vst.msk [vmem:[%s423 + $0x68] sm:$0xff] %vm1256, %v556
        %1271 = vst.msk [vmem:[%s423 + $0x70] sm:$0xff] %vm1256, %v561
        %1272 = vst.msk [vmem:[%s423 + $0x78] sm:$0xff] %vm1256, %v566
        %1273 = vst.msk [vmem:[%s423 + $0x80] sm:$0xff] %vm1256, %v571
        %1274 = vst.msk [vmem:[%s423 + $0x88] sm:$0xff] %vm1256, %v576
        %1275 = vst.msk [vmem:[%s423 + $0x90] sm:$0xff] %vm1256, %v581
        %1276 = vst.msk [vmem:[%s423 + $0x98] sm:$0xff] %vm1256, %v586
        %1277 = vst.msk [vmem:[%s423 + $0xa0] sm:$0xff] %vm1256, %v591
        %1278 = vst.msk [vmem:[%s423 + $0xa8] sm:$0xff] %vm1256, %v596
        %1279 = vst.msk [vmem:[%s423 + $0xb0] sm:$0xff] %vm1256, %v601
        %1280 = vst.msk [vmem:[%s423 + $0xb8] sm:$0xff] %vm1256, %v606
        %1281 = vst.msk [vmem:[%s423 + $0xc0] sm:$0xff] %vm1256, %v611
        %1282 = vst.msk [vmem:[%s423 + $0xc8] sm:$0xff] %vm1256, %v616
        %1283 = vst.msk [vmem:[%s423 + $0xd0] sm:$0xff] %vm1256, %v621
        %1284 = vst.msk [vmem:[%s423 + $0xd8] sm:$0xff] %vm1256, %v626
        %1285 = vst.msk [vmem:[%s423 + $0xe0] sm:$0xff] %vm1256, %v631
        %1286 = vst.msk [vmem:[%s423 + $0xe8] sm:$0xff] %vm1256, %v636
        %1287 = vst.msk [vmem:[%s423 + $0xf0] sm:$0xff] %vm1256, %v641
        %1288 = vst.msk [vmem:[%s423 + $0xf8] sm:$0xff] %vm1256, %v646
        %1289 = vst.msk [vmem:[%s423 + $0x100] sm:$0xff] %vm1256, %v651
        %1290 = vst.msk [vmem:[%s423 + $0x108] sm:$0xff] %vm1256, %v656
        %1291 = vst.msk [vmem:[%s423 + $0x110] sm:$0xff] %vm1256, %v661
        %1292 = vst.msk [vmem:[%s423 + $0x118] sm:$0xff] %vm1256, %v666
        %1293 = vst.msk [vmem:[%s423 + $0x120] sm:$0xff] %vm1256, %v671
        %1294 = vst.msk [vmem:[%s423 + $0x128] sm:$0xff] %vm1256, %v676
        %1295 = vst.msk [vmem:[%s423 + $0x130] sm:$0xff] %vm1256, %v681
        %1296 = vst.msk [vmem:[%s423 + $0x138] sm:$0xff] %vm1256, %v686
        %1297 = vst.msk [vmem:[%s423 + $0x140] sm:$0xff] %vm1256, %v691
        %1298 = vst.msk [vmem:[%s423 + $0x148] sm:$0xff] %vm1256, %v696
        %1299 = vst.msk [vmem:[%s423 + $0x150] sm:$0xff] %vm1256, %v701
        %1300 = vst.msk [vmem:[%s423 + $0x158] sm:$0xff] %vm1256, %v706
        %1301 = vst.msk [vmem:[%s423 + $0x160] sm:$0xff] %vm1256, %v711
        %1302 = vst.msk [vmem:[%s423 + $0x168] sm:$0xff] %vm1256, %v716
        %1303 = vst.msk [vmem:[%s423 + $0x170] sm:$0xff] %vm1256, %v721
        %1304 = vst.msk [vmem:[%s423 + $0x178] sm:$0xff] %vm1256, %v726
        %1305 = vst.msk [vmem:[%s423 + $0x180] sm:$0xff] %vm1256, %v731
        %1306 = vst.msk [vmem:[%s423 + $0x188] sm:$0xff] %vm1256, %v736
        %1307 = vst.msk [vmem:[%s423 + $0x190] sm:$0xff] %vm1256, %v741
        %1308 = vst.msk [vmem:[%s423 + $0x198] sm:$0xff] %vm1256, %v746
        %1309 = vst.msk [vmem:[%s423 + $0x1a0] sm:$0xff] %vm1256, %v751
        %1310 = vst.msk [vmem:[%s423 + $0x1a8] sm:$0xff] %vm1256, %v756
        %1311 = vst.msk [vmem:[%s423 + $0x1b0] sm:$0xff] %vm1256, %v761
        %1312 = vst.msk [vmem:[%s423 + $0x1b8] sm:$0xff] %vm1256, %v766
        %1313 = vst.msk [vmem:[%s423 + $0x1c0] sm:$0xff] %vm1256, %v771
        %1314 = vst.msk [vmem:[%s423 + $0x1c8] sm:$0xff] %vm1256, %v776
        %1315 = vst.msk [vmem:[%s423 + $0x1d0] sm:$0xff] %vm1256, %v781
        %1316 = vst.msk [vmem:[%s423 + $0x1d8] sm:$0xff] %vm1256, %v786
        %1317 = vst.msk [vmem:[%s423 + $0x1e0] sm:$0xff] %vm1256, %v791
        %1318 = vst.msk [vmem:[%s423 + $0x1e8] sm:$0xff] %vm1256, %v796
        %1319 = vst.msk [vmem:[%s423 + $0x1f0] sm:$0xff] %vm1256, %v801
        %1320 = vst.msk [vmem:[%s423 + $0x1f8] sm:$0xff] %vm1256, %v806
        %s1321 = scalar_lea.vmem %s423, 512 [#allocation3]
        %1322 = vst.msk [vmem:[%s1321] sm:$0xff] %vm1256, %v939
        %1323 = vst.msk [vmem:[%s1321 + $0x8] sm:$0xff] %vm1256, %v943
        %1324 = vst.msk [vmem:[%s1321 + $0x10] sm:$0xff] %vm1256, %v947
        %1325 = vst.msk [vmem:[%s1321 + $0x18] sm:$0xff] %vm1256, %v951
        %1326 = vst.msk [vmem:[%s1321 + $0x20] sm:$0xff] %vm1256, %v955
        %1327 = vst.msk [vmem:[%s1321 + $0x28] sm:$0xff] %vm1256, %v959
        %1328 = vst.msk [vmem:[%s1321 + $0x30] sm:$0xff] %vm1256, %v963
        %1329 = vst.msk [vmem:[%s1321 + $0x38] sm:$0xff] %vm1256, %v967
        %1330 = vst.msk [vmem:[%s1321 + $0x40] sm:$0xff] %vm1256, %v971
        %1331 = vst.msk [vmem:[%s1321 + $0x48] sm:$0xff] %vm1256, %v975
        %1332 = vst.msk [vmem:[%s1321 + $0x50] sm:$0xff] %vm1256, %v979
        %1333 = vst.msk [vmem:[%s1321 + $0x58] sm:$0xff] %vm1256, %v983
        %1334 = vst.msk [vmem:[%s1321 + $0x60] sm:$0xff] %vm1256, %v987
        %1335 = vst.msk [vmem:[%s1321 + $0x68] sm:$0xff] %vm1256, %v991
        %1336 = vst.msk [vmem:[%s1321 + $0x70] sm:$0xff] %vm1256, %v995
        %1337 = vst.msk [vmem:[%s1321 + $0x78] sm:$0xff] %vm1256, %v999
        %1338 = vst.msk [vmem:[%s1321 + $0x80] sm:$0xff] %vm1256, %v1003
        %1339 = vst.msk [vmem:[%s1321 + $0x88] sm:$0xff] %vm1256, %v1007
        %1340 = vst.msk [vmem:[%s1321 + $0x90] sm:$0xff] %vm1256, %v1011
        %1341 = vst.msk [vmem:[%s1321 + $0x98] sm:$0xff] %vm1256, %v1015
        %1342 = vst.msk [vmem:[%s1321 + $0xa0] sm:$0xff] %vm1256, %v1019
        %1343 = vst.msk [vmem:[%s1321 + $0xa8] sm:$0xff] %vm1256, %v1023
        %1344 = vst.msk [vmem:[%s1321 + $0xb0] sm:$0xff] %vm1256, %v1027
        %1345 = vst.msk [vmem:[%s1321 + $0xb8] sm:$0xff] %vm1256, %v1031
        %1346 = vst.msk [vmem:[%s1321 + $0xc0] sm:$0xff] %vm1256, %v1035
        %1347 = vst.msk [vmem:[%s1321 + $0xc8] sm:$0xff] %vm1256, %v1039
        %1348 = vst.msk [vmem:[%s1321 + $0xd0] sm:$0xff] %vm1256, %v1043
        %1349 = vst.msk [vmem:[%s1321 + $0xd8] sm:$0xff] %vm1256, %v1047
        %1350 = vst.msk [vmem:[%s1321 + $0xe0] sm:$0xff] %vm1256, %v1051
        %1351 = vst.msk [vmem:[%s1321 + $0xe8] sm:$0xff] %vm1256, %v1055
        %1352 = vst.msk [vmem:[%s1321 + $0xf0] sm:$0xff] %vm1256, %v1059
        %1353 = vst.msk [vmem:[%s1321 + $0xf8] sm:$0xff] %vm1256, %v1063
        %1354 = vst.msk [vmem:[%s1321 + $0x100] sm:$0xff] %vm1256, %v1067
        %1355 = vst.msk [vmem:[%s1321 + $0x108] sm:$0xff] %vm1256, %v1071
        %1356 = vst.msk [vmem:[%s1321 + $0x110] sm:$0xff] %vm1256, %v1075
        %1357 = vst.msk [vmem:[%s1321 + $0x118] sm:$0xff] %vm1256, %v1079
        %1358 = vst.msk [vmem:[%s1321 + $0x120] sm:$0xff] %vm1256, %v1083
        %1359 = vst.msk [vmem:[%s1321 + $0x128] sm:$0xff] %vm1256, %v1087
        %1360 = vst.msk [vmem:[%s1321 + $0x130] sm:$0xff] %vm1256, %v1091
        %1361 = vst.msk [vmem:[%s1321 + $0x138] sm:$0xff] %vm1256, %v1095
        %1362 = vst.msk [vmem:[%s1321 + $0x140] sm:$0xff] %vm1256, %v1099
        %1363 = vst.msk [vmem:[%s1321 + $0x148] sm:$0xff] %vm1256, %v1103
        %1364 = vst.msk [vmem:[%s1321 + $0x150] sm:$0xff] %vm1256, %v1107
        %1365 = vst.msk [vmem:[%s1321 + $0x158] sm:$0xff] %vm1256, %v1111
        %1366 = vst.msk [vmem:[%s1321 + $0x160] sm:$0xff] %vm1256, %v1115
        %1367 = vst.msk [vmem:[%s1321 + $0x168] sm:$0xff] %vm1256, %v1119
        %1368 = vst.msk [vmem:[%s1321 + $0x170] sm:$0xff] %vm1256, %v1123
        %1369 = vst.msk [vmem:[%s1321 + $0x178] sm:$0xff] %vm1256, %v1127
        %1370 = vst.msk [vmem:[%s1321 + $0x180] sm:$0xff] %vm1256, %v1131
        %1371 = vst.msk [vmem:[%s1321 + $0x188] sm:$0xff] %vm1256, %v1135
        %1372 = vst.msk [vmem:[%s1321 + $0x190] sm:$0xff] %vm1256, %v1139
        %1373 = vst.msk [vmem:[%s1321 + $0x198] sm:$0xff] %vm1256, %v1143
        %1374 = vst.msk [vmem:[%s1321 + $0x1a0] sm:$0xff] %vm1256, %v1147
        %1375 = vst.msk [vmem:[%s1321 + $0x1a8] sm:$0xff] %vm1256, %v1151
        %1376 = vst.msk [vmem:[%s1321 + $0x1b0] sm:$0xff] %vm1256, %v1155
        %1377 = vst.msk [vmem:[%s1321 + $0x1b8] sm:$0xff] %vm1256, %v1159
        %1378 = vst.msk [vmem:[%s1321 + $0x1c0] sm:$0xff] %vm1256, %v1163
        %1379 = vst.msk [vmem:[%s1321 + $0x1c8] sm:$0xff] %vm1256, %v1167
        %1380 = vst.msk [vmem:[%s1321 + $0x1d0] sm:$0xff] %vm1256, %v1171
        %1381 = vst.msk [vmem:[%s1321 + $0x1d8] sm:$0xff] %vm1256, %v1175
        %1382 = vst.msk [vmem:[%s1321 + $0x1e0] sm:$0xff] %vm1256, %v1179
        %1383 = vst.msk [vmem:[%s1321 + $0x1e8] sm:$0xff] %vm1256, %v1183
        %1384 = vst.msk [vmem:[%s1321 + $0x1f0] sm:$0xff] %vm1256, %v1187
        %1385 = vst.msk [vmem:[%s1321 + $0x1f8] sm:$0xff] %vm1256, %v1191
        %s1386 = sand.u32 %s68, 1
        %s1387 = sand.u32 %s68, 1
        %s1388 = smul.addr %s1387, 1024
        %s1389 = scalar_lea.vmem [#allocation3], %s1388
        // Predicated region
        $region67: #{tpu_custom_call.1} parent=61 // pred_check
          %p1390 = pneg %p78
        $region68: #{tpu_custom_call.1} parent=61 // pred_check_branch
          %1392 = sbr.rel (%p1390) target = $region70
        $region69: #{tpu_custom_call.1} parent=61 // pred_region
          %s1393 = smul.addr %s13, 8
          %s1394 = scalar_lea.vmem %s2, %s1393
          // Predicated region
          $region71: #{tpu_custom_call.1} parent=69 // pred_check
            _
          $region72: #{tpu_custom_call.1} parent=69 // pred_check_branch
            %1396 = sbr.rel (0) target = $region74
          $region73: #{tpu_custom_call.1} parent=69 // pred_region
            // Predicated region
            $region75: #{tpu_custom_call.1} parent=73 // pred_check
              _
            $region76: #{tpu_custom_call.1} parent=73 // pred_check_branch
              %1398 = sbr.rel (0) target = $region78
            $region77: #{tpu_custom_call.1} parent=73 // pred_region
              // Predicated region
              $region90: #{tpu_custom_call.1} parent=77 // pred_check
                _
              $region91: #{tpu_custom_call.1} parent=77 // pred_check_branch
                %1667 = sbr.rel (0) target = $region93
              $region92: #{tpu_custom_call.1} parent=77 // pred_region
                loop: start=0, step=1, limit=1
                $region94: #{tpu_custom_call.1} parent=92 // loop_pre_header
                  _
                $region95: #{tpu_custom_call.1} parent=92 // loop_header
                  %s1669 = sphi 0, %s1673
                  %p1670 = scmp.ge.s32.totalorder %s1669, 1
                  %s1674 = sphi %s1389, %s1389
                  %s1675 = sphi %s1394, %s1394
                $region96: #{tpu_custom_call.1} parent=92 // loop_header_branch
                  %1672 = sbr.rel (%p1670) target = $region100
                $region97: #{tpu_custom_call.1} parent=92 // loop_body
                  %v1676 = vld [vmem:[%s1674] sm:$0xff]
                  %1677 = vst [vmem:[%s1675] sm:$0xff] %v1676
                  %v1678 = vld [vmem:[%s1674 + $0x8] sm:$0xff]
                  %1679 = vst [vmem:[%s1675 + $0x10] sm:$0xff] %v1678
                  %v1680 = vld [vmem:[%s1674 + $0x10] sm:$0xff]
                  %1681 = vst [vmem:[%s1675 + $0x20] sm:$0xff] %v1680
                  %v1682 = vld [vmem:[%s1674 + $0x18] sm:$0xff]
                  %1683 = vst [vmem:[%s1675 + $0x30] sm:$0xff] %v1682
                  %v1684 = vld [vmem:[%s1674 + $0x20] sm:$0xff]
                  %1685 = vst [vmem:[%s1675 + $0x40] sm:$0xff] %v1684
                  %v1686 = vld [vmem:[%s1674 + $0x28] sm:$0xff]
                  %1687 = vst [vmem:[%s1675 + $0x50] sm:$0xff] %v1686
                  %v1688 = vld [vmem:[%s1674 + $0x30] sm:$0xff]
                  %1689 = vst [vmem:[%s1675 + $0x60] sm:$0xff] %v1688
                  %v1690 = vld [vmem:[%s1674 + $0x38] sm:$0xff]
                  %1691 = vst [vmem:[%s1675 + $0x70] sm:$0xff] %v1690
                  %v1692 = vld [vmem:[%s1674 + $0x40] sm:$0xff]
                  %1693 = vst [vmem:[%s1675 + $0x80] sm:$0xff] %v1692
                  %v1694 = vld [vmem:[%s1674 + $0x48] sm:$0xff]
                  %1695 = vst [vmem:[%s1675 + $0x90] sm:$0xff] %v1694
                  %v1696 = vld [vmem:[%s1674 + $0x50] sm:$0xff]
                  %1697 = vst [vmem:[%s1675 + $0xa0] sm:$0xff] %v1696
                  %v1698 = vld [vmem:[%s1674 + $0x58] sm:$0xff]
                  %1699 = vst [vmem:[%s1675 + $0xb0] sm:$0xff] %v1698
                  %v1700 = vld [vmem:[%s1674 + $0x60] sm:$0xff]
                  %1701 = vst [vmem:[%s1675 + $0xc0] sm:$0xff] %v1700
                  %v1702 = vld [vmem:[%s1674 + $0x68] sm:$0xff]
                  %1703 = vst [vmem:[%s1675 + $0xd0] sm:$0xff] %v1702
                  %v1704 = vld [vmem:[%s1674 + $0x70] sm:$0xff]
                  %1705 = vst [vmem:[%s1675 + $0xe0] sm:$0xff] %v1704
                  %v1706 = vld [vmem:[%s1674 + $0x78] sm:$0xff]
                  %1707 = vst [vmem:[%s1675 + $0xf0] sm:$0xff] %v1706
                  %v1708 = vld [vmem:[%s1674 + $0x80] sm:$0xff]
                  %1709 = vst [vmem:[%s1675 + $0x100] sm:$0xff] %v1708
                  %v1710 = vld [vmem:[%s1674 + $0x88] sm:$0xff]
                  %1711 = vst [vmem:[%s1675 + $0x110] sm:$0xff] %v1710
                  %v1712 = vld [vmem:[%s1674 + $0x90] sm:$0xff]
                  %1713 = vst [vmem:[%s1675 + $0x120] sm:$0xff] %v1712
                  %v1714 = vld [vmem:[%s1674 + $0x98] sm:$0xff]
                  %1715 = vst [vmem:[%s1675 + $0x130] sm:$0xff] %v1714
                  %v1716 = vld [vmem:[%s1674 + $0xa0] sm:$0xff]
                  %1717 = vst [vmem:[%s1675 + $0x140] sm:$0xff] %v1716
                  %v1718 = vld [vmem:[%s1674 + $0xa8] sm:$0xff]
                  %1719 = vst [vmem:[%s1675 + $0x150] sm:$0xff] %v1718
                  %v1720 = vld [vmem:[%s1674 + $0xb0] sm:$0xff]
                  %1721 = vst [vmem:[%s1675 + $0x160] sm:$0xff] %v1720
                  %v1722 = vld [vmem:[%s1674 + $0xb8] sm:$0xff]
                  %1723 = vst [vmem:[%s1675 + $0x170] sm:$0xff] %v1722
                  %v1724 = vld [vmem:[%s1674 + $0xc0] sm:$0xff]
                  %1725 = vst [vmem:[%s1675 + $0x180] sm:$0xff] %v1724
                  %v1726 = vld [vmem:[%s1674 + $0xc8] sm:$0xff]
                  %1727 = vst [vmem:[%s1675 + $0x190] sm:$0xff] %v1726
                  %v1728 = vld [vmem:[%s1674 + $0xd0] sm:$0xff]
                  %1729 = vst [vmem:[%s1675 + $0x1a0] sm:$0xff] %v1728
                  %v1730 = vld [vmem:[%s1674 + $0xd8] sm:$0xff]
                  %1731 = vst [vmem:[%s1675 + $0x1b0] sm:$0xff] %v1730
                  %v1732 = vld [vmem:[%s1674 + $0xe0] sm:$0xff]
                  %1733 = vst [vmem:[%s1675 + $0x1c0] sm:$0xff] %v1732
                  %v1734 = vld [vmem:[%s1674 + $0xe8] sm:$0xff]
                  %1735 = vst [vmem:[%s1675 + $0x1d0] sm:$0xff] %v1734
                  %v1736 = vld [vmem:[%s1674 + $0xf0] sm:$0xff]
                  %1737 = vst [vmem:[%s1675 + $0x1e0] sm:$0xff] %v1736
                  %v1738 = vld [vmem:[%s1674 + $0xf8] sm:$0xff]
                  %1739 = vst [vmem:[%s1675 + $0x1f0] sm:$0xff] %v1738
                  %v1740 = vld [vmem:[%s1674 + $0x100] sm:$0xff]
                  %1741 = vst [vmem:[%s1675 + $0x200] sm:$0xff] %v1740
                  %v1742 = vld [vmem:[%s1674 + $0x108] sm:$0xff]
                  %1743 = vst [vmem:[%s1675 + $0x210] sm:$0xff] %v1742
                  %v1744 = vld [vmem:[%s1674 + $0x110] sm:$0xff]
                  %1745 = vst [vmem:[%s1675 + $0x220] sm:$0xff] %v1744
                  %v1746 = vld [vmem:[%s1674 + $0x118] sm:$0xff]
                  %1747 = vst [vmem:[%s1675 + $0x230] sm:$0xff] %v1746
                  %v1748 = vld [vmem:[%s1674 + $0x120] sm:$0xff]
                  %1749 = vst [vmem:[%s1675 + $0x240] sm:$0xff] %v1748
                  %v1750 = vld [vmem:[%s1674 + $0x128] sm:$0xff]
                  %1751 = vst [vmem:[%s1675 + $0x250] sm:$0xff] %v1750
                  %v1752 = vld [vmem:[%s1674 + $0x130] sm:$0xff]
                  %1753 = vst [vmem:[%s1675 + $0x260] sm:$0xff] %v1752
                  %v1754 = vld [vmem:[%s1674 + $0x138] sm:$0xff]
                  %1755 = vst [vmem:[%s1675 + $0x270] sm:$0xff] %v1754
                  %v1756 = vld [vmem:[%s1674 + $0x140] sm:$0xff]
                  %1757 = vst [vmem:[%s1675 + $0x280] sm:$0xff] %v1756
                  %v1758 = vld [vmem:[%s1674 + $0x148] sm:$0xff]
                  %1759 = vst [vmem:[%s1675 + $0x290] sm:$0xff] %v1758
                  %v1760 = vld [vmem:[%s1674 + $0x150] sm:$0xff]
                  %1761 = vst [vmem:[%s1675 + $0x2a0] sm:$0xff] %v1760
                  %v1762 = vld [vmem:[%s1674 + $0x158] sm:$0xff]
                  %1763 = vst [vmem:[%s1675 + $0x2b0] sm:$0xff] %v1762
                  %v1764 = vld [vmem:[%s1674 + $0x160] sm:$0xff]
                  %1765 = vst [vmem:[%s1675 + $0x2c0] sm:$0xff] %v1764
                  %v1766 = vld [vmem:[%s1674 + $0x168] sm:$0xff]
                  %1767 = vst [vmem:[%s1675 + $0x2d0] sm:$0xff] %v1766
                  %v1768 = vld [vmem:[%s1674 + $0x170] sm:$0xff]
                  %1769 = vst [vmem:[%s1675 + $0x2e0] sm:$0xff] %v1768
                  %v1770 = vld [vmem:[%s1674 + $0x178] sm:$0xff]
                  %1771 = vst [vmem:[%s1675 + $0x2f0] sm:$0xff] %v1770
                  %v1772 = vld [vmem:[%s1674 + $0x180] sm:$0xff]
                  %1773 = vst [vmem:[%s1675 + $0x300] sm:$0xff] %v1772
                  %v1774 = vld [vmem:[%s1674 + $0x188] sm:$0xff]
                  %1775 = vst [vmem:[%s1675 + $0x310] sm:$0xff] %v1774
                  %v1776 = vld [vmem:[%s1674 + $0x190] sm:$0xff]
                  %1777 = vst [vmem:[%s1675 + $0x320] sm:$0xff] %v1776
                  %v1778 = vld [vmem:[%s1674 + $0x198] sm:$0xff]
                  %1779 = vst [vmem:[%s1675 + $0x330] sm:$0xff] %v1778
                  %v1780 = vld [vmem:[%s1674 + $0x1a0] sm:$0xff]
                  %1781 = vst [vmem:[%s1675 + $0x340] sm:$0xff] %v1780
                  %v1782 = vld [vmem:[%s1674 + $0x1a8] sm:$0xff]
                  %1783 = vst [vmem:[%s1675 + $0x350] sm:$0xff] %v1782
                  %v1784 = vld [vmem:[%s1674 + $0x1b0] sm:$0xff]
                  %1785 = vst [vmem:[%s1675 + $0x360] sm:$0xff] %v1784
                  %v1786 = vld [vmem:[%s1674 + $0x1b8] sm:$0xff]
                  %1787 = vst [vmem:[%s1675 + $0x370] sm:$0xff] %v1786
                  %v1788 = vld [vmem:[%s1674 + $0x1c0] sm:$0xff]
                  %1789 = vst [vmem:[%s1675 + $0x380] sm:$0xff] %v1788
                  %v1790 = vld [vmem:[%s1674 + $0x1c8] sm:$0xff]
                  %1791 = vst [vmem:[%s1675 + $0x390] sm:$0xff] %v1790
                  %v1792 = vld [vmem:[%s1674 + $0x1d0] sm:$0xff]
                  %1793 = vst [vmem:[%s1675 + $0x3a0] sm:$0xff] %v1792
                  %v1794 = vld [vmem:[%s1674 + $0x1d8] sm:$0xff]
                  %1795 = vst [vmem:[%s1675 + $0x3b0] sm:$0xff] %v1794
                  %v1796 = vld [vmem:[%s1674 + $0x1e0] sm:$0xff]
                  %1797 = vst [vmem:[%s1675 + $0x3c0] sm:$0xff] %v1796
                  %v1798 = vld [vmem:[%s1674 + $0x1e8] sm:$0xff]
                  %1799 = vst [vmem:[%s1675 + $0x3d0] sm:$0xff] %v1798
                  %v1800 = vld [vmem:[%s1674 + $0x1f0] sm:$0xff]
                  %1801 = vst [vmem:[%s1675 + $0x3e0] sm:$0xff] %v1800
                  %v1802 = vld [vmem:[%s1674 + $0x1f8] sm:$0xff]
                  %1803 = vst [vmem:[%s1675 + $0x3f0] sm:$0xff] %v1802
                  %v1804 = vld [vmem:[%s1674 + $0x200] sm:$0xff]
                  %1805 = vst [vmem:[%s1675 + $0x400] sm:$0xff] %v1804
                  %v1806 = vld [vmem:[%s1674 + $0x208] sm:$0xff]
                  %1807 = vst [vmem:[%s1675 + $0x410] sm:$0xff] %v1806
                  %v1808 = vld [vmem:[%s1674 + $0x210] sm:$0xff]
                  %1809 = vst [vmem:[%s1675 + $0x420] sm:$0xff] %v1808
                  %v1810 = vld [vmem:[%s1674 + $0x218] sm:$0xff]
                  %1811 = vst [vmem:[%s1675 + $0x430] sm:$0xff] %v1810
                  %v1812 = vld [vmem:[%s1674 + $0x220] sm:$0xff]
                  %1813 = vst [vmem:[%s1675 + $0x440] sm:$0xff] %v1812
                  %v1814 = vld [vmem:[%s1674 + $0x228] sm:$0xff]
                  %1815 = vst [vmem:[%s1675 + $0x450] sm:$0xff] %v1814
                  %v1816 = vld [vmem:[%s1674 + $0x230] sm:$0xff]
                  %1817 = vst [vmem:[%s1675 + $0x460] sm:$0xff] %v1816
                  %v1818 = vld [vmem:[%s1674 + $0x238] sm:$0xff]
                  %1819 = vst [vmem:[%s1675 + $0x470] sm:$0xff] %v1818
                  %v1820 = vld [vmem:[%s1674 + $0x240] sm:$0xff]
                  %1821 = vst [vmem:[%s1675 + $0x480] sm:$0xff] %v1820
                  %v1822 = vld [vmem:[%s1674 + $0x248] sm:$0xff]
                  %1823 = vst [vmem:[%s1675 + $0x490] sm:$0xff] %v1822
                  %v1824 = vld [vmem:[%s1674 + $0x250] sm:$0xff]
                  %1825 = vst [vmem:[%s1675 + $0x4a0] sm:$0xff] %v1824
                  %v1826 = vld [vmem:[%s1674 + $0x258] sm:$0xff]
                  %1827 = vst [vmem:[%s1675 + $0x4b0] sm:$0xff] %v1826
                  %v1828 = vld [vmem:[%s1674 + $0x260] sm:$0xff]
                  %1829 = vst [vmem:[%s1675 + $0x4c0] sm:$0xff] %v1828
                  %v1830 = vld [vmem:[%s1674 + $0x268] sm:$0xff]
                  %1831 = vst [vmem:[%s1675 + $0x4d0] sm:$0xff] %v1830
                  %v1832 = vld [vmem:[%s1674 + $0x270] sm:$0xff]
                  %1833 = vst [vmem:[%s1675 + $0x4e0] sm:$0xff] %v1832
                  %v1834 = vld [vmem:[%s1674 + $0x278] sm:$0xff]
                  %1835 = vst [vmem:[%s1675 + $0x4f0] sm:$0xff] %v1834
                  %v1836 = vld [vmem:[%s1674 + $0x280] sm:$0xff]
                  %1837 = vst [vmem:[%s1675 + $0x500] sm:$0xff] %v1836
                  %v1838 = vld [vmem:[%s1674 + $0x288] sm:$0xff]
                  %1839 = vst [vmem:[%s1675 + $0x510] sm:$0xff] %v1838
                  %v1840 = vld [vmem:[%s1674 + $0x290] sm:$0xff]
                  %1841 = vst [vmem:[%s1675 + $0x520] sm:$0xff] %v1840
                  %v1842 = vld [vmem:[%s1674 + $0x298] sm:$0xff]
                  %1843 = vst [vmem:[%s1675 + $0x530] sm:$0xff] %v1842
                  %v1844 = vld [vmem:[%s1674 + $0x2a0] sm:$0xff]
                  %1845 = vst [vmem:[%s1675 + $0x540] sm:$0xff] %v1844
                  %v1846 = vld [vmem:[%s1674 + $0x2a8] sm:$0xff]
                  %1847 = vst [vmem:[%s1675 + $0x550] sm:$0xff] %v1846
                  %v1848 = vld [vmem:[%s1674 + $0x2b0] sm:$0xff]
                  %1849 = vst [vmem:[%s1675 + $0x560] sm:$0xff] %v1848
                  %v1850 = vld [vmem:[%s1674 + $0x2b8] sm:$0xff]
                  %1851 = vst [vmem:[%s1675 + $0x570] sm:$0xff] %v1850
                  %v1852 = vld [vmem:[%s1674 + $0x2c0] sm:$0xff]
                  %1853 = vst [vmem:[%s1675 + $0x580] sm:$0xff] %v1852
                  %v1854 = vld [vmem:[%s1674 + $0x2c8] sm:$0xff]
                  %1855 = vst [vmem:[%s1675 + $0x590] sm:$0xff] %v1854
                  %v1856 = vld [vmem:[%s1674 + $0x2d0] sm:$0xff]
                  %1857 = vst [vmem:[%s1675 + $0x5a0] sm:$0xff] %v1856
                  %v1858 = vld [vmem:[%s1674 + $0x2d8] sm:$0xff]
                  %1859 = vst [vmem:[%s1675 + $0x5b0] sm:$0xff] %v1858
                  %v1860 = vld [vmem:[%s1674 + $0x2e0] sm:$0xff]
                  %1861 = vst [vmem:[%s1675 + $0x5c0] sm:$0xff] %v1860
                  %v1862 = vld [vmem:[%s1674 + $0x2e8] sm:$0xff]
                  %1863 = vst [vmem:[%s1675 + $0x5d0] sm:$0xff] %v1862
                  %v1864 = vld [vmem:[%s1674 + $0x2f0] sm:$0xff]
                  %1865 = vst [vmem:[%s1675 + $0x5e0] sm:$0xff] %v1864
                  %v1866 = vld [vmem:[%s1674 + $0x2f8] sm:$0xff]
                  %1867 = vst [vmem:[%s1675 + $0x5f0] sm:$0xff] %v1866
                  %v1868 = vld [vmem:[%s1674 + $0x300] sm:$0xff]
                  %1869 = vst [vmem:[%s1675 + $0x600] sm:$0xff] %v1868
                  %v1870 = vld [vmem:[%s1674 + $0x308] sm:$0xff]
                  %1871 = vst [vmem:[%s1675 + $0x610] sm:$0xff] %v1870
                  %v1872 = vld [vmem:[%s1674 + $0x310] sm:$0xff]
                  %1873 = vst [vmem:[%s1675 + $0x620] sm:$0xff] %v1872
                  %v1874 = vld [vmem:[%s1674 + $0x318] sm:$0xff]
                  %1875 = vst [vmem:[%s1675 + $0x630] sm:$0xff] %v1874
                  %v1876 = vld [vmem:[%s1674 + $0x320] sm:$0xff]
                  %1877 = vst [vmem:[%s1675 + $0x640] sm:$0xff] %v1876
                  %v1878 = vld [vmem:[%s1674 + $0x328] sm:$0xff]
                  %1879 = vst [vmem:[%s1675 + $0x650] sm:$0xff] %v1878
                  %v1880 = vld [vmem:[%s1674 + $0x330] sm:$0xff]
                  %1881 = vst [vmem:[%s1675 + $0x660] sm:$0xff] %v1880
                  %v1882 = vld [vmem:[%s1674 + $0x338] sm:$0xff]
                  %1883 = vst [vmem:[%s1675 + $0x670] sm:$0xff] %v1882
                  %v1884 = vld [vmem:[%s1674 + $0x340] sm:$0xff]
                  %1885 = vst [vmem:[%s1675 + $0x680] sm:$0xff] %v1884
                  %v1886 = vld [vmem:[%s1674 + $0x348] sm:$0xff]
                  %1887 = vst [vmem:[%s1675 + $0x690] sm:$0xff] %v1886
                  %v1888 = vld [vmem:[%s1674 + $0x350] sm:$0xff]
                  %1889 = vst [vmem:[%s1675 + $0x6a0] sm:$0xff] %v1888
                  %v1890 = vld [vmem:[%s1674 + $0x358] sm:$0xff]
                  %1891 = vst [vmem:[%s1675 + $0x6b0] sm:$0xff] %v1890
                  %v1892 = vld [vmem:[%s1674 + $0x360] sm:$0xff]
                  %1893 = vst [vmem:[%s1675 + $0x6c0] sm:$0xff] %v1892
                  %v1894 = vld [vmem:[%s1674 + $0x368] sm:$0xff]
                  %1895 = vst [vmem:[%s1675 + $0x6d0] sm:$0xff] %v1894
                  %v1896 = vld [vmem:[%s1674 + $0x370] sm:$0xff]
                  %1897 = vst [vmem:[%s1675 + $0x6e0] sm:$0xff] %v1896
                  %v1898 = vld [vmem:[%s1674 + $0x378] sm:$0xff]
                  %1899 = vst [vmem:[%s1675 + $0x6f0] sm:$0xff] %v1898
                  %v1900 = vld [vmem:[%s1674 + $0x380] sm:$0xff]
                  %1901 = vst [vmem:[%s1675 + $0x700] sm:$0xff] %v1900
                  %v1902 = vld [vmem:[%s1674 + $0x388] sm:$0xff]
                  %1903 = vst [vmem:[%s1675 + $0x710] sm:$0xff] %v1902
                  %v1904 = vld [vmem:[%s1674 + $0x390] sm:$0xff]
                  %1905 = vst [vmem:[%s1675 + $0x720] sm:$0xff] %v1904
                  %v1906 = vld [vmem:[%s1674 + $0x398] sm:$0xff]
                  %1907 = vst [vmem:[%s1675 + $0x730] sm:$0xff] %v1906
                  %v1908 = vld [vmem:[%s1674 + $0x3a0] sm:$0xff]
                  %1909 = vst [vmem:[%s1675 + $0x740] sm:$0xff] %v1908
                  %v1910 = vld [vmem:[%s1674 + $0x3a8] sm:$0xff]
                  %1911 = vst [vmem:[%s1675 + $0x750] sm:$0xff] %v1910
                  %v1912 = vld [vmem:[%s1674 + $0x3b0] sm:$0xff]
                  %1913 = vst [vmem:[%s1675 + $0x760] sm:$0xff] %v1912
                  %v1914 = vld [vmem:[%s1674 + $0x3b8] sm:$0xff]
                  %1915 = vst [vmem:[%s1675 + $0x770] sm:$0xff] %v1914
                  %v1916 = vld [vmem:[%s1674 + $0x3c0] sm:$0xff]
                  %1917 = vst [vmem:[%s1675 + $0x780] sm:$0xff] %v1916
                  %v1918 = vld [vmem:[%s1674 + $0x3c8] sm:$0xff]
                  %1919 = vst [vmem:[%s1675 + $0x790] sm:$0xff] %v1918
                  %v1920 = vld [vmem:[%s1674 + $0x3d0] sm:$0xff]
                  %1921 = vst [vmem:[%s1675 + $0x7a0] sm:$0xff] %v1920
                  %v1922 = vld [vmem:[%s1674 + $0x3d8] sm:$0xff]
                  %1923 = vst [vmem:[%s1675 + $0x7b0] sm:$0xff] %v1922
                  %v1924 = vld [vmem:[%s1674 + $0x3e0] sm:$0xff]
                  %1925 = vst [vmem:[%s1675 + $0x7c0] sm:$0xff] %v1924
                  %v1926 = vld [vmem:[%s1674 + $0x3e8] sm:$0xff]
                  %1927 = vst [vmem:[%s1675 + $0x7d0] sm:$0xff] %v1926
                  %v1928 = vld [vmem:[%s1674 + $0x3f0] sm:$0xff]
                  %1929 = vst [vmem:[%s1675 + $0x7e0] sm:$0xff] %v1928
                  %v1930 = vld [vmem:[%s1674 + $0x3f8] sm:$0xff]
                  %1931 = vst [vmem:[%s1675 + $0x7f0] sm:$0xff] %v1930
                $region98: #{tpu_custom_call.1} parent=92 // loop_footer
                  %s1673 = sadd.s32 1, %s1669
                $region99: #{tpu_custom_call.1} parent=92 // loop_footer_branch
                  %1668 = sbr.rel target = $region95
                $region100: #{tpu_custom_call.1} parent=92 // loop_exit
                  _
              $region93: #{tpu_custom_call.1} parent=77 // pred_fallthru
                _
              // Predicated region
              $region101: #{tpu_custom_call.1} parent=77 // pred_check
                _
              $region102: #{tpu_custom_call.1} parent=77 // pred_check_branch
                %1933 = sbr.rel target = $region104
              $region103: #{tpu_custom_call.1} parent=77 // pred_region
                _
              $region104: #{tpu_custom_call.1} parent=77 // pred_fallthru
                _
            $region78: #{tpu_custom_call.1} parent=73 // pred_fallthru
              _
            // Predicated region
            $region79: #{tpu_custom_call.1} parent=73 // pred_check
              _
            $region80: #{tpu_custom_call.1} parent=73 // pred_check_branch
              %1400 = sbr.rel target = $region82
            $region81: #{tpu_custom_call.1} parent=73 // pred_region
              loop: start=0, step=1, limit=1
              $region83: #{tpu_custom_call.1} parent=81 // loop_pre_header
                _
              $region84: #{tpu_custom_call.1} parent=81 // loop_header
                %s1403 = sphi 0, %s1407
                %p1404 = scmp.ge.s32.totalorder %s1403, 1
                %s1408 = sphi %s1389, %s1389
                %s1409 = sphi %s1394, %s1394
              $region85: #{tpu_custom_call.1} parent=81 // loop_header_branch
                %1406 = sbr.rel (%p1404) target = $region89
              $region86: #{tpu_custom_call.1} parent=81 // loop_body
                %v1410 = vld [vmem:[%s1408] sm:$0xff]
                %1411 = vst [vmem:[%s1409] sm:$0xff] %v1410
                %v1412 = vld [vmem:[%s1408 + $0x8] sm:$0xff]
                %1413 = vst [vmem:[%s1409 + $0x10] sm:$0xff] %v1412
                %v1414 = vld [vmem:[%s1408 + $0x10] sm:$0xff]
                %1415 = vst [vmem:[%s1409 + $0x20] sm:$0xff] %v1414
                %v1416 = vld [vmem:[%s1408 + $0x18] sm:$0xff]
                %1417 = vst [vmem:[%s1409 + $0x30] sm:$0xff] %v1416
                %v1418 = vld [vmem:[%s1408 + $0x20] sm:$0xff]
                %1419 = vst [vmem:[%s1409 + $0x40] sm:$0xff] %v1418
                %v1420 = vld [vmem:[%s1408 + $0x28] sm:$0xff]
                %1421 = vst [vmem:[%s1409 + $0x50] sm:$0xff] %v1420
                %v1422 = vld [vmem:[%s1408 + $0x30] sm:$0xff]
                %1423 = vst [vmem:[%s1409 + $0x60] sm:$0xff] %v1422
                %v1424 = vld [vmem:[%s1408 + $0x38] sm:$0xff]
                %1425 = vst [vmem:[%s1409 + $0x70] sm:$0xff] %v1424
                %v1426 = vld [vmem:[%s1408 + $0x40] sm:$0xff]
                %1427 = vst [vmem:[%s1409 + $0x80] sm:$0xff] %v1426
                %v1428 = vld [vmem:[%s1408 + $0x48] sm:$0xff]
                %1429 = vst [vmem:[%s1409 + $0x90] sm:$0xff] %v1428
                %v1430 = vld [vmem:[%s1408 + $0x50] sm:$0xff]
                %1431 = vst [vmem:[%s1409 + $0xa0] sm:$0xff] %v1430
                %v1432 = vld [vmem:[%s1408 + $0x58] sm:$0xff]
                %1433 = vst [vmem:[%s1409 + $0xb0] sm:$0xff] %v1432
                %v1434 = vld [vmem:[%s1408 + $0x60] sm:$0xff]
                %1435 = vst [vmem:[%s1409 + $0xc0] sm:$0xff] %v1434
                %v1436 = vld [vmem:[%s1408 + $0x68] sm:$0xff]
                %1437 = vst [vmem:[%s1409 + $0xd0] sm:$0xff] %v1436
                %v1438 = vld [vmem:[%s1408 + $0x70] sm:$0xff]
                %1439 = vst [vmem:[%s1409 + $0xe0] sm:$0xff] %v1438
                %v1440 = vld [vmem:[%s1408 + $0x78] sm:$0xff]
                %1441 = vst [vmem:[%s1409 + $0xf0] sm:$0xff] %v1440
                %v1442 = vld [vmem:[%s1408 + $0x80] sm:$0xff]
                %1443 = vst [vmem:[%s1409 + $0x100] sm:$0xff] %v1442
                %v1444 = vld [vmem:[%s1408 + $0x88] sm:$0xff]
                %1445 = vst [vmem:[%s1409 + $0x110] sm:$0xff] %v1444
                %v1446 = vld [vmem:[%s1408 + $0x90] sm:$0xff]
                %1447 = vst [vmem:[%s1409 + $0x120] sm:$0xff] %v1446
                %v1448 = vld [vmem:[%s1408 + $0x98] sm:$0xff]
                %1449 = vst [vmem:[%s1409 + $0x130] sm:$0xff] %v1448
                %v1450 = vld [vmem:[%s1408 + $0xa0] sm:$0xff]
                %1451 = vst [vmem:[%s1409 + $0x140] sm:$0xff] %v1450
                %v1452 = vld [vmem:[%s1408 + $0xa8] sm:$0xff]
                %1453 = vst [vmem:[%s1409 + $0x150] sm:$0xff] %v1452
                %v1454 = vld [vmem:[%s1408 + $0xb0] sm:$0xff]
                %1455 = vst [vmem:[%s1409 + $0x160] sm:$0xff] %v1454
                %v1456 = vld [vmem:[%s1408 + $0xb8] sm:$0xff]
                %1457 = vst [vmem:[%s1409 + $0x170] sm:$0xff] %v1456
                %v1458 = vld [vmem:[%s1408 + $0xc0] sm:$0xff]
                %1459 = vst [vmem:[%s1409 + $0x180] sm:$0xff] %v1458
                %v1460 = vld [vmem:[%s1408 + $0xc8] sm:$0xff]
                %1461 = vst [vmem:[%s1409 + $0x190] sm:$0xff] %v1460
                %v1462 = vld [vmem:[%s1408 + $0xd0] sm:$0xff]
                %1463 = vst [vmem:[%s1409 + $0x1a0] sm:$0xff] %v1462
                %v1464 = vld [vmem:[%s1408 + $0xd8] sm:$0xff]
                %1465 = vst [vmem:[%s1409 + $0x1b0] sm:$0xff] %v1464
                %v1466 = vld [vmem:[%s1408 + $0xe0] sm:$0xff]
                %1467 = vst [vmem:[%s1409 + $0x1c0] sm:$0xff] %v1466
                %v1468 = vld [vmem:[%s1408 + $0xe8] sm:$0xff]
                %1469 = vst [vmem:[%s1409 + $0x1d0] sm:$0xff] %v1468
                %v1470 = vld [vmem:[%s1408 + $0xf0] sm:$0xff]
                %1471 = vst [vmem:[%s1409 + $0x1e0] sm:$0xff] %v1470
                %v1472 = vld [vmem:[%s1408 + $0xf8] sm:$0xff]
                %1473 = vst [vmem:[%s1409 + $0x1f0] sm:$0xff] %v1472
                %v1474 = vld [vmem:[%s1408 + $0x100] sm:$0xff]
                %1475 = vst [vmem:[%s1409 + $0x200] sm:$0xff] %v1474
                %v1476 = vld [vmem:[%s1408 + $0x108] sm:$0xff]
                %1477 = vst [vmem:[%s1409 + $0x210] sm:$0xff] %v1476
                %v1478 = vld [vmem:[%s1408 + $0x110] sm:$0xff]
                %1479 = vst [vmem:[%s1409 + $0x220] sm:$0xff] %v1478
                %v1480 = vld [vmem:[%s1408 + $0x118] sm:$0xff]
                %1481 = vst [vmem:[%s1409 + $0x230] sm:$0xff] %v1480
                %v1482 = vld [vmem:[%s1408 + $0x120] sm:$0xff]
                %1483 = vst [vmem:[%s1409 + $0x240] sm:$0xff] %v1482
                %v1484 = vld [vmem:[%s1408 + $0x128] sm:$0xff]
                %1485 = vst [vmem:[%s1409 + $0x250] sm:$0xff] %v1484
                %v1486 = vld [vmem:[%s1408 + $0x130] sm:$0xff]
                %1487 = vst [vmem:[%s1409 + $0x260] sm:$0xff] %v1486
                %v1488 = vld [vmem:[%s1408 + $0x138] sm:$0xff]
                %1489 = vst [vmem:[%s1409 + $0x270] sm:$0xff] %v1488
                %v1490 = vld [vmem:[%s1408 + $0x140] sm:$0xff]
                %1491 = vst [vmem:[%s1409 + $0x280] sm:$0xff] %v1490
                %v1492 = vld [vmem:[%s1408 + $0x148] sm:$0xff]
                %1493 = vst [vmem:[%s1409 + $0x290] sm:$0xff] %v1492
                %v1494 = vld [vmem:[%s1408 + $0x150] sm:$0xff]
                %1495 = vst [vmem:[%s1409 + $0x2a0] sm:$0xff] %v1494
                %v1496 = vld [vmem:[%s1408 + $0x158] sm:$0xff]
                %1497 = vst [vmem:[%s1409 + $0x2b0] sm:$0xff] %v1496
                %v1498 = vld [vmem:[%s1408 + $0x160] sm:$0xff]
                %1499 = vst [vmem:[%s1409 + $0x2c0] sm:$0xff] %v1498
                %v1500 = vld [vmem:[%s1408 + $0x168] sm:$0xff]
                %1501 = vst [vmem:[%s1409 + $0x2d0] sm:$0xff] %v1500
                %v1502 = vld [vmem:[%s1408 + $0x170] sm:$0xff]
                %1503 = vst [vmem:[%s1409 + $0x2e0] sm:$0xff] %v1502
                %v1504 = vld [vmem:[%s1408 + $0x178] sm:$0xff]
                %1505 = vst [vmem:[%s1409 + $0x2f0] sm:$0xff] %v1504
                %v1506 = vld [vmem:[%s1408 + $0x180] sm:$0xff]
                %1507 = vst [vmem:[%s1409 + $0x300] sm:$0xff] %v1506
                %v1508 = vld [vmem:[%s1408 + $0x188] sm:$0xff]
                %1509 = vst [vmem:[%s1409 + $0x310] sm:$0xff] %v1508
                %v1510 = vld [vmem:[%s1408 + $0x190] sm:$0xff]
                %1511 = vst [vmem:[%s1409 + $0x320] sm:$0xff] %v1510
                %v1512 = vld [vmem:[%s1408 + $0x198] sm:$0xff]
                %1513 = vst [vmem:[%s1409 + $0x330] sm:$0xff] %v1512
                %v1514 = vld [vmem:[%s1408 + $0x1a0] sm:$0xff]
                %1515 = vst [vmem:[%s1409 + $0x340] sm:$0xff] %v1514
                %v1516 = vld [vmem:[%s1408 + $0x1a8] sm:$0xff]
                %1517 = vst [vmem:[%s1409 + $0x350] sm:$0xff] %v1516
                %v1518 = vld [vmem:[%s1408 + $0x1b0] sm:$0xff]
                %1519 = vst [vmem:[%s1409 + $0x360] sm:$0xff] %v1518
                %v1520 = vld [vmem:[%s1408 + $0x1b8] sm:$0xff]
                %1521 = vst [vmem:[%s1409 + $0x370] sm:$0xff] %v1520
                %v1522 = vld [vmem:[%s1408 + $0x1c0] sm:$0xff]
                %1523 = vst [vmem:[%s1409 + $0x380] sm:$0xff] %v1522
                %v1524 = vld [vmem:[%s1408 + $0x1c8] sm:$0xff]
                %1525 = vst [vmem:[%s1409 + $0x390] sm:$0xff] %v1524
                %v1526 = vld [vmem:[%s1408 + $0x1d0] sm:$0xff]
                %1527 = vst [vmem:[%s1409 + $0x3a0] sm:$0xff] %v1526
                %v1528 = vld [vmem:[%s1408 + $0x1d8] sm:$0xff]
                %1529 = vst [vmem:[%s1409 + $0x3b0] sm:$0xff] %v1528
                %v1530 = vld [vmem:[%s1408 + $0x1e0] sm:$0xff]
                %1531 = vst [vmem:[%s1409 + $0x3c0] sm:$0xff] %v1530
                %v1532 = vld [vmem:[%s1408 + $0x1e8] sm:$0xff]
                %1533 = vst [vmem:[%s1409 + $0x3d0] sm:$0xff] %v1532
                %v1534 = vld [vmem:[%s1408 + $0x1f0] sm:$0xff]
                %1535 = vst [vmem:[%s1409 + $0x3e0] sm:$0xff] %v1534
                %v1536 = vld [vmem:[%s1408 + $0x1f8] sm:$0xff]
                %1537 = vst [vmem:[%s1409 + $0x3f0] sm:$0xff] %v1536
                %v1538 = vld [vmem:[%s1408 + $0x200] sm:$0xff]
                %1539 = vst [vmem:[%s1409 + $0x400] sm:$0xff] %v1538
                %v1540 = vld [vmem:[%s1408 + $0x208] sm:$0xff]
                %1541 = vst [vmem:[%s1409 + $0x410] sm:$0xff] %v1540
                %v1542 = vld [vmem:[%s1408 + $0x210] sm:$0xff]
                %1543 = vst [vmem:[%s1409 + $0x420] sm:$0xff] %v1542
                %v1544 = vld [vmem:[%s1408 + $0x218] sm:$0xff]
                %1545 = vst [vmem:[%s1409 + $0x430] sm:$0xff] %v1544
                %v1546 = vld [vmem:[%s1408 + $0x220] sm:$0xff]
                %1547 = vst [vmem:[%s1409 + $0x440] sm:$0xff] %v1546
                %v1548 = vld [vmem:[%s1408 + $0x228] sm:$0xff]
                %1549 = vst [vmem:[%s1409 + $0x450] sm:$0xff] %v1548
                %v1550 = vld [vmem:[%s1408 + $0x230] sm:$0xff]
                %1551 = vst [vmem:[%s1409 + $0x460] sm:$0xff] %v1550
                %v1552 = vld [vmem:[%s1408 + $0x238] sm:$0xff]
                %1553 = vst [vmem:[%s1409 + $0x470] sm:$0xff] %v1552
                %v1554 = vld [vmem:[%s1408 + $0x240] sm:$0xff]
                %1555 = vst [vmem:[%s1409 + $0x480] sm:$0xff] %v1554
                %v1556 = vld [vmem:[%s1408 + $0x248] sm:$0xff]
                %1557 = vst [vmem:[%s1409 + $0x490] sm:$0xff] %v1556
                %v1558 = vld [vmem:[%s1408 + $0x250] sm:$0xff]
                %1559 = vst [vmem:[%s1409 + $0x4a0] sm:$0xff] %v1558
                %v1560 = vld [vmem:[%s1408 + $0x258] sm:$0xff]
                %1561 = vst [vmem:[%s1409 + $0x4b0] sm:$0xff] %v1560
                %v1562 = vld [vmem:[%s1408 + $0x260] sm:$0xff]
                %1563 = vst [vmem:[%s1409 + $0x4c0] sm:$0xff] %v1562
                %v1564 = vld [vmem:[%s1408 + $0x268] sm:$0xff]
                %1565 = vst [vmem:[%s1409 + $0x4d0] sm:$0xff] %v1564
                %v1566 = vld [vmem:[%s1408 + $0x270] sm:$0xff]
                %1567 = vst [vmem:[%s1409 + $0x4e0] sm:$0xff] %v1566
                %v1568 = vld [vmem:[%s1408 + $0x278] sm:$0xff]
                %1569 = vst [vmem:[%s1409 + $0x4f0] sm:$0xff] %v1568
                %v1570 = vld [vmem:[%s1408 + $0x280] sm:$0xff]
                %1571 = vst [vmem:[%s1409 + $0x500] sm:$0xff] %v1570
                %v1572 = vld [vmem:[%s1408 + $0x288] sm:$0xff]
                %1573 = vst [vmem:[%s1409 + $0x510] sm:$0xff] %v1572
                %v1574 = vld [vmem:[%s1408 + $0x290] sm:$0xff]
                %1575 = vst [vmem:[%s1409 + $0x520] sm:$0xff] %v1574
                %v1576 = vld [vmem:[%s1408 + $0x298] sm:$0xff]
                %1577 = vst [vmem:[%s1409 + $0x530] sm:$0xff] %v1576
                %v1578 = vld [vmem:[%s1408 + $0x2a0] sm:$0xff]
                %1579 = vst [vmem:[%s1409 + $0x540] sm:$0xff] %v1578
                %v1580 = vld [vmem:[%s1408 + $0x2a8] sm:$0xff]
                %1581 = vst [vmem:[%s1409 + $0x550] sm:$0xff] %v1580
                %v1582 = vld [vmem:[%s1408 + $0x2b0] sm:$0xff]
                %1583 = vst [vmem:[%s1409 + $0x560] sm:$0xff] %v1582
                %v1584 = vld [vmem:[%s1408 + $0x2b8] sm:$0xff]
                %1585 = vst [vmem:[%s1409 + $0x570] sm:$0xff] %v1584
                %v1586 = vld [vmem:[%s1408 + $0x2c0] sm:$0xff]
                %1587 = vst [vmem:[%s1409 + $0x580] sm:$0xff] %v1586
                %v1588 = vld [vmem:[%s1408 + $0x2c8] sm:$0xff]
                %1589 = vst [vmem:[%s1409 + $0x590] sm:$0xff] %v1588
                %v1590 = vld [vmem:[%s1408 + $0x2d0] sm:$0xff]
                %1591 = vst [vmem:[%s1409 + $0x5a0] sm:$0xff] %v1590
                %v1592 = vld [vmem:[%s1408 + $0x2d8] sm:$0xff]
                %1593 = vst [vmem:[%s1409 + $0x5b0] sm:$0xff] %v1592
                %v1594 = vld [vmem:[%s1408 + $0x2e0] sm:$0xff]
                %1595 = vst [vmem:[%s1409 + $0x5c0] sm:$0xff] %v1594
                %v1596 = vld [vmem:[%s1408 + $0x2e8] sm:$0xff]
                %1597 = vst [vmem:[%s1409 + $0x5d0] sm:$0xff] %v1596
                %v1598 = vld [vmem:[%s1408 + $0x2f0] sm:$0xff]
                %1599 = vst [vmem:[%s1409 + $0x5e0] sm:$0xff] %v1598
                %v1600 = vld [vmem:[%s1408 + $0x2f8] sm:$0xff]
                %1601 = vst [vmem:[%s1409 + $0x5f0] sm:$0xff] %v1600
                %v1602 = vld [vmem:[%s1408 + $0x300] sm:$0xff]
                %1603 = vst [vmem:[%s1409 + $0x600] sm:$0xff] %v1602
                %v1604 = vld [vmem:[%s1408 + $0x308] sm:$0xff]
                %1605 = vst [vmem:[%s1409 + $0x610] sm:$0xff] %v1604
                %v1606 = vld [vmem:[%s1408 + $0x310] sm:$0xff]
                %1607 = vst [vmem:[%s1409 + $0x620] sm:$0xff] %v1606
                %v1608 = vld [vmem:[%s1408 + $0x318] sm:$0xff]
                %1609 = vst [vmem:[%s1409 + $0x630] sm:$0xff] %v1608
                %v1610 = vld [vmem:[%s1408 + $0x320] sm:$0xff]
                %1611 = vst [vmem:[%s1409 + $0x640] sm:$0xff] %v1610
                %v1612 = vld [vmem:[%s1408 + $0x328] sm:$0xff]
                %1613 = vst [vmem:[%s1409 + $0x650] sm:$0xff] %v1612
                %v1614 = vld [vmem:[%s1408 + $0x330] sm:$0xff]
                %1615 = vst [vmem:[%s1409 + $0x660] sm:$0xff] %v1614
                %v1616 = vld [vmem:[%s1408 + $0x338] sm:$0xff]
                %1617 = vst [vmem:[%s1409 + $0x670] sm:$0xff] %v1616
                %v1618 = vld [vmem:[%s1408 + $0x340] sm:$0xff]
                %1619 = vst [vmem:[%s1409 + $0x680] sm:$0xff] %v1618
                %v1620 = vld [vmem:[%s1408 + $0x348] sm:$0xff]
                %1621 = vst [vmem:[%s1409 + $0x690] sm:$0xff] %v1620
                %v1622 = vld [vmem:[%s1408 + $0x350] sm:$0xff]
                %1623 = vst [vmem:[%s1409 + $0x6a0] sm:$0xff] %v1622
                %v1624 = vld [vmem:[%s1408 + $0x358] sm:$0xff]
                %1625 = vst [vmem:[%s1409 + $0x6b0] sm:$0xff] %v1624
                %v1626 = vld [vmem:[%s1408 + $0x360] sm:$0xff]
                %1627 = vst [vmem:[%s1409 + $0x6c0] sm:$0xff] %v1626
                %v1628 = vld [vmem:[%s1408 + $0x368] sm:$0xff]
                %1629 = vst [vmem:[%s1409 + $0x6d0] sm:$0xff] %v1628
                %v1630 = vld [vmem:[%s1408 + $0x370] sm:$0xff]
                %1631 = vst [vmem:[%s1409 + $0x6e0] sm:$0xff] %v1630
                %v1632 = vld [vmem:[%s1408 + $0x378] sm:$0xff]
                %1633 = vst [vmem:[%s1409 + $0x6f0] sm:$0xff] %v1632
                %v1634 = vld [vmem:[%s1408 + $0x380] sm:$0xff]
                %1635 = vst [vmem:[%s1409 + $0x700] sm:$0xff] %v1634
                %v1636 = vld [vmem:[%s1408 + $0x388] sm:$0xff]
                %1637 = vst [vmem:[%s1409 + $0x710] sm:$0xff] %v1636
                %v1638 = vld [vmem:[%s1408 + $0x390] sm:$0xff]
                %1639 = vst [vmem:[%s1409 + $0x720] sm:$0xff] %v1638
                %v1640 = vld [vmem:[%s1408 + $0x398] sm:$0xff]
                %1641 = vst [vmem:[%s1409 + $0x730] sm:$0xff] %v1640
                %v1642 = vld [vmem:[%s1408 + $0x3a0] sm:$0xff]
                %1643 = vst [vmem:[%s1409 + $0x740] sm:$0xff] %v1642
                %v1644 = vld [vmem:[%s1408 + $0x3a8] sm:$0xff]
                %1645 = vst [vmem:[%s1409 + $0x750] sm:$0xff] %v1644
                %v1646 = vld [vmem:[%s1408 + $0x3b0] sm:$0xff]
                %1647 = vst [vmem:[%s1409 + $0x760] sm:$0xff] %v1646
                %v1648 = vld [vmem:[%s1408 + $0x3b8] sm:$0xff]
                %1649 = vst [vmem:[%s1409 + $0x770] sm:$0xff] %v1648
                %v1650 = vld [vmem:[%s1408 + $0x3c0] sm:$0xff]
                %1651 = vst [vmem:[%s1409 + $0x780] sm:$0xff] %v1650
                %v1652 = vld [vmem:[%s1408 + $0x3c8] sm:$0xff]
                %1653 = vst [vmem:[%s1409 + $0x790] sm:$0xff] %v1652
                %v1654 = vld [vmem:[%s1408 + $0x3d0] sm:$0xff]
                %1655 = vst [vmem:[%s1409 + $0x7a0] sm:$0xff] %v1654
                %v1656 = vld [vmem:[%s1408 + $0x3d8] sm:$0xff]
                %1657 = vst [vmem:[%s1409 + $0x7b0] sm:$0xff] %v1656
                %v1658 = vld [vmem:[%s1408 + $0x3e0] sm:$0xff]
                %1659 = vst [vmem:[%s1409 + $0x7c0] sm:$0xff] %v1658
                %v1660 = vld [vmem:[%s1408 + $0x3e8] sm:$0xff]
                %1661 = vst [vmem:[%s1409 + $0x7d0] sm:$0xff] %v1660
                %v1662 = vld [vmem:[%s1408 + $0x3f0] sm:$0xff]
                %1663 = vst [vmem:[%s1409 + $0x7e0] sm:$0xff] %v1662
                %v1664 = vld [vmem:[%s1408 + $0x3f8] sm:$0xff]
                %1665 = vst [vmem:[%s1409 + $0x7f0] sm:$0xff] %v1664
              $region87: #{tpu_custom_call.1} parent=81 // loop_footer
                %s1407 = sadd.s32 1, %s1403
              $region88: #{tpu_custom_call.1} parent=81 // loop_footer_branch
                %1402 = sbr.rel target = $region84
              $region89: #{tpu_custom_call.1} parent=81 // loop_exit
                _
            $region82: #{tpu_custom_call.1} parent=73 // pred_fallthru
              _
          $region74: #{tpu_custom_call.1} parent=69 // pred_fallthru
            _
          %1934 = vnop
        $region70: #{tpu_custom_call.1} parent=61 // pred_fallthru
          _
      $region62: #{tpu_custom_call.1} parent=5 // pred_fallthru
        _
      %p1935 = scmp.le.s32.totalorder 2, %s8
      // Predicated region
      $region105: #{tpu_custom_call.1} parent=5 // pred_check
        %p1936 = pneg %p1935
      $region106: #{tpu_custom_call.1} parent=5 // pred_check_branch
        %1938 = sbr.rel (%p1936) target = $region108
      $region107: #{tpu_custom_call.1} parent=5 // pred_region
        %s1939 = ssub.s32 %s8, 2
        // Predicated region
        $region109: #{tpu_custom_call.1} parent=107 // pred_check
          %p1940 = pneg %p84
        $region110: #{tpu_custom_call.1} parent=107 // pred_check_branch
          %1942 = sbr.rel (%p1940) target = $region112
        $region111: #{tpu_custom_call.1} parent=107 // pred_region
          %s1943 = sand.u32 %s69, 1
          %s1944 = sand.u32 %s69, 1
          %s1945 = smul.addr %s1944, 1024
          %s1946 = scalar_lea.vmem [#allocation3], %s1945
        $region112: #{tpu_custom_call.1} parent=107 // pred_fallthru
          _
      $region108: #{tpu_custom_call.1} parent=5 // pred_fallthru
        _
    $region6: #{tpu_custom_call.1} parent=1 // loop_footer
      %s12 = sadd.s32 1, %s8
    $region7: #{tpu_custom_call.1} parent=1 // loop_footer_branch
      %7 = sbr.rel target = $region3
    $region8: #{tpu_custom_call.1} parent=1 // loop_exit
      _

</llo_original>
